<compile_context>
chip_gen: v7x
topology: tpu7x:2x2x1
jax: 0.10.0
libtpu: 0.0.40
codegen_flags: <defaults>
</compile_context>

<pallas_src>
import functools

import jax
import jax.numpy as jnp
from jax.experimental import pallas as pl
from jax.experimental.pallas import tpu as pltpu

_LANE = 128


def _round_up(x, m):
    return ((x + m - 1) // m) * m


def _stnet_kernel(x_ref, a_ref, w1t_ref, b1_ref, w2t_ref, b2_ref, o_ref, *,
                  use_bf16_mxu):
    """One grid step processes S (batch, time) slabs: block [S, N, Cp]."""
    x = x_ref[...]                       # [S, N, Cp]   (Cp = 128-padded C)
    a = a_ref[...]                       # [N, N]       normalized adjacency
    w1t = w1t_ref[...]                   # [Cp, Hp]     pre-transposed conv1
    w2t = w2t_ref[...]                   # [Hp, Cp]     pre-transposed conv2

    mm_dtype = jnp.bfloat16 if use_bf16_mxu else x.dtype

    S, N, Cp = x.shape

    # Continuous graph propagation over the node axis, batched over S slabs.
    mixed = jnp.einsum(
        "nm,smc->snc",
        a.astype(mm_dtype), x.astype(mm_dtype),
        preferred_element_type=jnp.float32)              # [S, N, Cp] f32

    # Merge leading dims (lane dim unchanged -> layout-free) so both channel
    # matmuls run as single lane-dense [S*N, 128] x [128, 128] MXU matmuls.
    mixed2 = mixed.reshape(S * N, Cp)

    # 1x1 conv (C -> H) + bias + tanh   (bias/tanh kept in f32: v5e-safe)
    h = jnp.dot(mixed2.astype(mm_dtype), w1t.astype(mm_dtype),
                preferred_element_type=jnp.float32)
    h = jnp.tanh(h + b1_ref[...])                        # [S*N, Hp]

    # 1x1 conv (H -> C) + bias
    y = jnp.dot(h.astype(mm_dtype), w2t.astype(mm_dtype),
                preferred_element_type=jnp.float32)
    y = y + b2_ref[...]                                  # [S*N, Cp]

    o_ref[...] = y.reshape(S, N, Cp).astype(o_ref.dtype)


def ode_func_forward(t, x_nchw, a_hat, w1, b1, w2, b2, *, use_bf16_mxu=False):
    """ODEFunc.forward(t, x) -> stnet(x).  `t` is ignored, matching PyTorch."""
    del t  # ODEFunc ignores t
    B, C, N, T = x_nchw.shape
    H = w1.shape[0]

    Cp = _round_up(C, _LANE)
    Hp = _round_up(H, _LANE)

    BT = B * T
    # 2 parallel grid steps when possible (keeps both v7x TensorCores busy);
    # otherwise a single fused step.
    num_blocks = 2 if BT % 2 == 0 else 1
    S = BT // num_blocks

    # Layout glue: NCHW [B, C, N, T] -> [B*T, N, Cp]  (one fused XLA
    # transpose+pad; everything inside the kernel is then lane-dense).
    x_slab = jnp.transpose(x_nchw, (0, 3, 2, 1)).reshape(BT, N, C)
    x_slab = jnp.pad(x_slab, ((0, 0), (0, 0), (0, Cp - C)))

    # Pre-transpose + pad parameters host-side (once per call, not per step).
    w1t = jnp.pad(w1.T, ((0, Cp - C), (0, Hp - H)))      # [Cp, Hp]
    w2t = jnp.pad(w2.T, ((0, Hp - H), (0, Cp - C)))      # [Hp, Cp]
    b1p = jnp.pad(b1, (0, Hp - H)).reshape(1, Hp)
    b2p = jnp.pad(b2, (0, Cp - C)).reshape(1, Cp)

    kernel = functools.partial(_stnet_kernel, use_bf16_mxu=use_bf16_mxu)

    out_slab = pl.pallas_call(
        kernel,
        out_shape=jax.ShapeDtypeStruct((BT, N, Cp), x_slab.dtype),
        grid_spec=pltpu.PrefetchScalarGridSpec(
            num_scalar_prefetch=0,
            grid=(num_blocks,),
            in_specs=[
                pl.BlockSpec((S, N, Cp), lambda i: (i, 0, 0)),   # x block
                pl.BlockSpec((N, N), lambda i: (0, 0)),          # adjacency
                pl.BlockSpec((Cp, Hp), lambda i: (0, 0)),        # conv1 W^T
                pl.BlockSpec((1, Hp), lambda i: (0, 0)),         # conv1 bias
                pl.BlockSpec((Hp, Cp), lambda i: (0, 0)),        # conv2 W^T
                pl.BlockSpec((1, Cp), lambda i: (0, 0)),         # conv2 bias
            ],
            out_specs=pl.BlockSpec((S, N, Cp), lambda i: (i, 0, 0)),
        ),
        compiler_params=pltpu.CompilerParams(
            dimension_semantics=("parallel",)),
    )(x_slab, a_hat, w1t, b1p, w2t, b2p)

    # Glue back: strip channel padding, [B*T, N, C] -> NCHW [B, C, N, T].
    out = out_slab[..., :C].reshape(B, T, N, C)
    return jnp.transpose(out, (0, 3, 2, 1))


def _stnet_reference(x_nchw, a_hat, w1, b1, w2, b2):
    """Plain-JAX reference matching the PyTorch stnet semantics."""
    B, C, N, T = x_nchw.shape
    x3 = jnp.transpose(x_nchw, (0, 3, 2, 1)).reshape(B * T, N, C)
    mixed = jnp.einsum("nm,bmc->bnc", a_hat, x3)
    h = jnp.tanh(jnp.einsum("bnc,hc->bnh", mixed, w1) + b1)
    y = jnp.einsum("bnh,ch->bnc", h, w2) + b2
    return jnp.transpose(y.reshape(B, T, N, C), (0, 3, 2, 1))


if __name__ == "__main__":
    # Small shapes consistent with an MTGODE-style stnet input [B, C, N, T].
    B, C, N, T, H = 2, 4, 16, 8, 32

    key = jax.random.PRNGKey(0)
    kx, k1, k2, k3, k4 = jax.random.split(key, 5)

    x = jax.random.normal(kx, (B, C, N, T), dtype=jnp.float32)

    # Deterministic parameters (synthetic init, no checkpoint load).
    w1 = 0.1 * jax.random.normal(k1, (H, C), dtype=jnp.float32)   # Conv2d(C->H, k=1)
    b1 = 0.1 * jax.random.normal(k2, (H,), dtype=jnp.float32)
    w2 = 0.1 * jax.random.normal(k3, (C, H), dtype=jnp.float32)   # Conv2d(H->C, k=1)
    b2 = 0.1 * jax.random.normal(k4, (C,), dtype=jnp.float32)

    # Deterministic normalized adjacency A_hat = D^{-1} (A + I) of a ring graph.
    ring = jnp.eye(N, dtype=jnp.float32)
    ring = ring + jnp.roll(jnp.eye(N, dtype=jnp.float32), 1, axis=1)
    ring = ring + jnp.roll(jnp.eye(N, dtype=jnp.float32), -1, axis=1)
    a_hat = ring / jnp.sum(ring, axis=1, keepdims=True)

    t = jnp.float32(0.5)  # ODEFunc ignores t
    out = ode_func_forward(t, x, a_hat, w1, b1, w2, b2)
    out = jax.block_until_ready(out)

    ref = _stnet_reference(x, a_hat, w1, b1, w2, b2)
    if not jnp.allclose(out, ref, rtol=1e-5, atol=1e-5):
        raise AssertionError("Pallas kernel output does not match reference")

    print("KERNEL_OK")
</pallas_src>

<mosaic_0001>
module attributes {stable_mosaic.version = 11 : i64} {
  func.func @_stnet_kernel(%arg0: i32, %arg1: memref<8x16x128xf32, #tpu.memory_space<vmem>>, %arg2: memref<16x16xf32, #tpu.memory_space<vmem>>, %arg3: memref<128x128xf32, #tpu.memory_space<vmem>>, %arg4: memref<1x128xf32, #tpu.memory_space<vmem>>, %arg5: memref<128x128xf32, #tpu.memory_space<vmem>>, %arg6: memref<1x128xf32, #tpu.memory_space<vmem>>, %arg7: memref<8x16x128xf32, #tpu.memory_space<vmem>>) attributes {dimension_semantics = [#tpu.dimension_semantics<parallel>], iteration_bounds = array<i64: 2>, scalar_prefetch = 0 : i64, scratch_operands = 0 : i64, tpu.core_type = #tpu.core_type<tc>, window_params = [{transform_indices = @transform_0, window_bounds = array<i64: 8, 16, 128>}, {pipeline_mode = #tpu.pipeline_mode<synchronous>, transform_indices = @transform_1, window_bounds = array<i64: 16, 16>}, {pipeline_mode = #tpu.pipeline_mode<synchronous>, transform_indices = @transform_2, window_bounds = array<i64: 128, 128>}, {pipeline_mode = #tpu.pipeline_mode<synchronous>, transform_indices = @transform_3, window_bounds = array<i64: 1, 128>}, {pipeline_mode = #tpu.pipeline_mode<synchronous>, transform_indices = @transform_4, window_bounds = array<i64: 128, 128>}, {pipeline_mode = #tpu.pipeline_mode<synchronous>, transform_indices = @transform_5, window_bounds = array<i64: 1, 128>}, {transform_indices = @transform_6, window_bounds = array<i64: 8, 16, 128>}]} {
    %c0 = arith.constant 0 : index
    %c0_0 = arith.constant 0 : index
    %c0_1 = arith.constant 0 : index
    %0 = vector.load %arg1[%c0, %c0_0, %c0_1] : memref<8x16x128xf32, #tpu.memory_space<vmem>>, vector<8x16x128xf32>
    %c0_2 = arith.constant 0 : index
    %c0_3 = arith.constant 0 : index
    %1 = vector.load %arg2[%c0_2, %c0_3] : memref<16x16xf32, #tpu.memory_space<vmem>>, vector<16x16xf32>
    %c0_4 = arith.constant 0 : index
    %c0_5 = arith.constant 0 : index
    %2 = vector.load %arg3[%c0_4, %c0_5] : memref<128x128xf32, #tpu.memory_space<vmem>>, vector<128x128xf32>
    %c0_6 = arith.constant 0 : index
    %c0_7 = arith.constant 0 : index
    %3 = vector.load %arg5[%c0_6, %c0_7] : memref<128x128xf32, #tpu.memory_space<vmem>>, vector<128x128xf32>
    "tpu.trace_start"() <{level = 10 : i32, message = "nm,smc->snc"}> : () -> ()
    %cst = arith.constant dense<0.000000e+00> : vector<8x128x16xf32>
    %4 = tpu.matmul %0, %1, %cst {dimension_numbers = #tpu.dot_dimension_numbers<[1], [1], [0, 2], [0], [0, 0, 0, 2, 1, 0], [], []>} : vector<8x16x128xf32>, vector<16x16xf32>, vector<8x128x16xf32> -> vector<8x128x16xf32>
    %5 = tpu.transpose %4, [0, 2, 1] : vector<8x128x16xf32> -> vector<8x16x128xf32>
    "tpu.trace_stop"() : () -> ()
    %6 = vector.shape_cast %5 : vector<8x16x128xf32> to vector<128x128xf32>
    %cst_8 = arith.constant dense<0.000000e+00> : vector<128x128xf32>
    %7 = tpu.matmul %6, %2, %cst_8 {dimension_numbers = #tpu.dot_dimension_numbers<[1], [0], [0], [1], [0, 0, 1, 1], [], []>} : vector<128x128xf32>, vector<128x128xf32>, vector<128x128xf32> -> vector<128x128xf32>
    %c0_9 = arith.constant 0 : index
    %c0_10 = arith.constant 0 : index
    %8 = vector.load %arg4[%c0_9, %c0_10] : memref<1x128xf32, #tpu.memory_space<vmem>>, vector<1x128xf32>
    %9 = vector.broadcast %8 : vector<1x128xf32> to vector<128x128xf32>
    %10 = arith.addf %7, %9 : vector<128x128xf32>
    %11 = math.tanh %10 : vector<128x128xf32>
    %cst_11 = arith.constant dense<0.000000e+00> : vector<128x128xf32>
    %12 = tpu.matmul %11, %3, %cst_11 {dimension_numbers = #tpu.dot_dimension_numbers<[1], [0], [0], [1], [0, 0, 1, 1], [], []>} : vector<128x128xf32>, vector<128x128xf32>, vector<128x128xf32> -> vector<128x128xf32>
    %c0_12 = arith.constant 0 : index
    %c0_13 = arith.constant 0 : index
    %13 = vector.load %arg6[%c0_12, %c0_13] : memref<1x128xf32, #tpu.memory_space<vmem>>, vector<1x128xf32>
    %14 = vector.broadcast %13 : vector<1x128xf32> to vector<128x128xf32>
    %15 = arith.addf %12, %14 : vector<128x128xf32>
    %16 = vector.shape_cast %15 : vector<128x128xf32> to vector<8x16x128xf32>
    %c0_14 = arith.constant 0 : index
    %c0_15 = arith.constant 0 : index
    %c0_16 = arith.constant 0 : index
    %17 = vector.load %arg7[%c0_14, %c0_15, %c0_16] : memref<8x16x128xf32, #tpu.memory_space<vmem>>, vector<8x16x128xf32>
    tpu.vector_store %arg7[%c0_14, %c0_15, %c0_16], %16 {strides = array<i32>} : memref<8x16x128xf32, #tpu.memory_space<vmem>>, vector<8x16x128xf32>,
    return
  }
  func.func @transform_0(%arg0: i32) -> (i32, i32, i32) {
    %c0_i32 = arith.constant 0 : i32
    %c0_i32_0 = arith.constant 0 : i32
    %c0_i32_1 = arith.constant 0 : i32
    return %arg0, %c0_i32, %c0_i32_0 : i32, i32, i32
  }
  func.func @transform_1(%arg0: i32) -> (i32, i32) {
    %c0_i32 = arith.constant 0 : i32
    %c0_i32_0 = arith.constant 0 : i32
    %c0_i32_1 = arith.constant 0 : i32
    return %c0_i32, %c0_i32_0 : i32, i32
  }
  func.func @transform_2(%arg0: i32) -> (i32, i32) {
    %c0_i32 = arith.constant 0 : i32
    %c0_i32_0 = arith.constant 0 : i32
    %c0_i32_1 = arith.constant 0 : i32
    return %c0_i32, %c0_i32_0 : i32, i32
  }
  func.func @transform_3(%arg0: i32) -> (i32, i32) {
    %c0_i32 = arith.constant 0 : i32
    %c0_i32_0 = arith.constant 0 : i32
    %c0_i32_1 = arith.constant 0 : i32
    return %c0_i32, %c0_i32_0 : i32, i32
  }
  func.func @transform_4(%arg0: i32) -> (i32, i32) {
    %c0_i32 = arith.constant 0 : i32
    %c0_i32_0 = arith.constant 0 : i32
    %c0_i32_1 = arith.constant 0 : i32
    return %c0_i32, %c0_i32_0 : i32, i32
  }
  func.func @transform_5(%arg0: i32) -> (i32, i32) {
    %c0_i32 = arith.constant 0 : i32
    %c0_i32_0 = arith.constant 0 : i32
    %c0_i32_1 = arith.constant 0 : i32
    return %c0_i32, %c0_i32_0 : i32, i32
  }
  func.func @transform_6(%arg0: i32) -> (i32, i32, i32) {
    %c0_i32 = arith.constant 0 : i32
    %c0_i32_0 = arith.constant 0 : i32
    %c0_i32_1 = arith.constant 0 : i32
    return %arg0, %c0_i32, %c0_i32_0 : i32, i32, i32
  }
}

</mosaic_0001>

<llo_original>
// kernel: tpu_custom_call.1
$region0: #{tpu_custom_call.1}
  #allocation0 [shape = 'u32[]', space=smem, size = 0x4, offset = 0x4, fixed_abs, tag = 'smem constant byte address 0x4 - core index']
  #allocation1 [shape = 'u32[144,128]{1,0:T(1,128)}', space=vmem, size = 0x12000, scoped, tag = 'internal scratch']
  %s0 = inlined_call_operand.hbm [shape: f32[16,16,128], index: 0, kind: input, shape index: {}]
  %s1 = inlined_call_operand.hbm [shape: f32[16,16], index: 1, kind: input, shape index: {}]
  %s2 = inlined_call_operand.hbm [shape: f32[128,128], index: 2, kind: input, shape index: {}]
  %s3 = inlined_call_operand.vmem [shape: f32[1,128], index: 3, kind: input, shape index: {}]
  %s4 = inlined_call_operand.hbm [shape: f32[128,128], index: 4, kind: input, shape index: {}]
  %s5 = inlined_call_operand.vmem [shape: f32[1,128], index: 5, kind: input, shape index: {}]
  %s6 = inlined_call_operand.hbm [shape: f32[16,16,128], index: 6, kind: output, shape index: {}]
  %s7 = sld [smem:[#allocation0]]
  $region73: #{tpu_custom_call.1} parent=0
    _
  %s9 = ssub.s32 1, %s7
  %s10 = scalar_select 0, %s9, %s7
  $region1: #{tpu_custom_call.1} parent=0
    #allocation2 [shape = 'u8[131072]{0}', space=vmem, size = 0x20000, scoped, tag = 'input window, operand 0']
    #allocation3 [shape = 's32[2]{0}', space=sflag, size = 0x8, scoped, tag = 'scoped memory for tpu_custom_call.1']
    #allocation4 [shape = 's32[2]{0}', space=sflag, size = 0x8, scoped, tag = 'scoped memory for tpu_custom_call.1']
    #allocation5 [shape = 'u8[8192]{0}', space=vmem, size = 0x2000, scoped, tag = 'input window, operand 1, single buffered']
    #allocation6 [shape = 's32[1]{0}', space=sflag, size = 0x4, scoped, tag = 'scoped memory for tpu_custom_call.1']
    #allocation7 [shape = 'u8[65536]{0}', space=vmem, size = 0x10000, scoped, tag = 'input window, operand 2, single buffered']
    #allocation8 [shape = 'u8[65536]{0}', space=vmem, size = 0x10000, scoped, tag = 'input window, operand 4, single buffered']
    #allocation9 [shape = 's32[1]{0}', space=sflag, size = 0x4, scoped, tag = 'scoped memory for tpu_custom_call.1']
    #allocation10 [shape = 'u8[131072]{0}', space=vmem, size = 0x20000, scoped, tag = 'output window, operand 0']
    %11 = vsyncpa [#allocation3], 0
    %s12 = scalar_lea.sflag [#allocation3], 1
    %13 = vsyncpa %s12, 0
    %14 = vsyncpa [#allocation6], 0
    %15 = vsyncpa [#allocation9], 0
    %16 = vsyncpa [#allocation4], 0
    %s17 = scalar_lea.sflag [#allocation4], 1
    %18 = vsyncpa %s17, 0
    loop: start=0, step=1, limit=4
    $region2: #{tpu_custom_call.1} parent=1 // loop_pre_header
      _
    $region3: #{tpu_custom_call.1} parent=1 // loop_header
      %s20 = sphi 0, %s24
      %p21 = scmp.ge.s32.totalorder %s20, 4
      %s30 = sphi 0, %s32
      %s33 = sphi 0, %s30
      %s34 = sphi 0, %s33
      %s50 = sphi 0, %s34
      %s54 = sphi 0, %s54
      %s56 = sphi 0, %s54
      %s57 = sphi 0, %s56
      %s71 = sphi 0, %s57
      %s75 = sphi 0, %s75
      %s77 = sphi 0, %s75
      %s78 = sphi 0, %s77
      %s92 = sphi 0, %s78
      %s96 = sphi 0, %s96
      %s98 = sphi 0, %s96
      %s99 = sphi 0, %s98
      %s113 = sphi 0, %s99
      %s117 = sphi 0, %s117
      %s119 = sphi 0, %s117
      %s120 = sphi 0, %s119
      %s134 = sphi 0, %s120
      %s138 = sphi 0, %s138
      %s140 = sphi 0, %s138
      %s141 = sphi 0, %s140
      %s155 = sphi 0, %s141
      %s161 = sphi 0, %s163
      %s164 = sphi 0, %s161
      %s165 = sphi 0, %s164
      %s181 = sphi 0, %s165
    $region4: #{tpu_custom_call.1} parent=1 // loop_header_branch
      %23 = sbr.rel (%p21) target = $region8
    $region5: #{tpu_custom_call.1} parent=1 // loop_body
      %s25 = ssub.s32 %s20, 1
      %s26 = ssub.s32 %s20, 2
      %s27 = sadd.s32 %s20, 1
      %s28 = ssub.s32 %s20, %s27
      %p29 = scmp.eq.s32.totalorder %s28, 0
      %s31 = sadd.s32 %s30, 1
      %s32 = scalar_select %p29, %s30, %s31
      %p35 = pneg %p29
      %p36 = scmp.eq.s32.totalorder %s20, 1
      %p37 = por %p35, %p36
      %p38 = scmp.ne.s32.totalorder %s30, %s33
      %p39 = scmp.eq.s32.totalorder %s20, 0
      %p40 = por %p38, %p39
      %p41 = scmp.ne.s32.totalorder %s30, %s33
      %p42 = scmp.eq.s32.totalorder %s25, 1
      %p43 = por %p41, %p42
      %p44 = scmp.ne.s32.totalorder %s33, %s34
      %p45 = scmp.eq.s32.totalorder %s25, 0
      %p46 = por %p44, %p45
      %p47 = scmp.ne.s32.totalorder %s33, %s34
      %p48 = scmp.eq.s32.totalorder %s26, 1
      %p49 = por %p47, %p48
      %p51 = scmp.ne.s32.totalorder %s34, %s50
      %p52 = scmp.eq.s32.totalorder %s26, 0
      %p53 = por %p51, %p52
      %s55 = sadd.s32 %s54, 1
      %p58 = scmp.eq.s32.totalorder %s20, 1
      %p59 = scmp.ne.s32.totalorder %s54, %s56
      %p60 = scmp.eq.s32.totalorder %s20, 0
      %p61 = por %p59, %p60
      %p62 = scmp.ne.s32.totalorder %s54, %s56
      %p63 = scmp.eq.s32.totalorder %s25, 1
      %p64 = por %p62, %p63
      %p65 = scmp.ne.s32.totalorder %s56, %s57
      %p66 = scmp.eq.s32.totalorder %s25, 0
      %p67 = por %p65, %p66
      %p68 = scmp.ne.s32.totalorder %s56, %s57
      %p69 = scmp.eq.s32.totalorder %s26, 1
      %p70 = por %p68, %p69
      %p72 = scmp.ne.s32.totalorder %s57, %s71
      %p73 = scmp.eq.s32.totalorder %s26, 0
      %p74 = por %p72, %p73
      %s76 = sadd.s32 %s75, 1
      %p79 = scmp.eq.s32.totalorder %s20, 1
      %p80 = scmp.ne.s32.totalorder %s75, %s77
      %p81 = scmp.eq.s32.totalorder %s20, 0
      %p82 = por %p80, %p81
      %p83 = scmp.ne.s32.totalorder %s75, %s77
      %p84 = scmp.eq.s32.totalorder %s25, 1
      %p85 = por %p83, %p84
      %p86 = scmp.ne.s32.totalorder %s77, %s78
      %p87 = scmp.eq.s32.totalorder %s25, 0
      %p88 = por %p86, %p87
      %p89 = scmp.ne.s32.totalorder %s77, %s78
      %p90 = scmp.eq.s32.totalorder %s26, 1
      %p91 = por %p89, %p90
      %p93 = scmp.ne.s32.totalorder %s78, %s92
      %p94 = scmp.eq.s32.totalorder %s26, 0
      %p95 = por %p93, %p94
      %s97 = sadd.s32 %s96, 1
      %p100 = scmp.eq.s32.totalorder %s20, 1
      %p101 = scmp.ne.s32.totalorder %s96, %s98
      %p102 = scmp.eq.s32.totalorder %s20, 0
      %p103 = por %p101, %p102
      %p104 = scmp.ne.s32.totalorder %s96, %s98
      %p105 = scmp.eq.s32.totalorder %s25, 1
      %p106 = por %p104, %p105
      %p107 = scmp.ne.s32.totalorder %s98, %s99
      %p108 = scmp.eq.s32.totalorder %s25, 0
      %p109 = por %p107, %p108
      %p110 = scmp.ne.s32.totalorder %s98, %s99
      %p111 = scmp.eq.s32.totalorder %s26, 1
      %p112 = por %p110, %p111
      %p114 = scmp.ne.s32.totalorder %s99, %s113
      %p115 = scmp.eq.s32.totalorder %s26, 0
      %p116 = por %p114, %p115
      %s118 = sadd.s32 %s117, 1
      %p121 = scmp.eq.s32.totalorder %s20, 1
      %p122 = scmp.ne.s32.totalorder %s117, %s119
      %p123 = scmp.eq.s32.totalorder %s20, 0
      %p124 = por %p122, %p123
      %p125 = scmp.ne.s32.totalorder %s117, %s119
      %p126 = scmp.eq.s32.totalorder %s25, 1
      %p127 = por %p125, %p126
      %p128 = scmp.ne.s32.totalorder %s119, %s120
      %p129 = scmp.eq.s32.totalorder %s25, 0
      %p130 = por %p128, %p129
      %p131 = scmp.ne.s32.totalorder %s119, %s120
      %p132 = scmp.eq.s32.totalorder %s26, 1
      %p133 = por %p131, %p132
      %p135 = scmp.ne.s32.totalorder %s120, %s134
      %p136 = scmp.eq.s32.totalorder %s26, 0
      %p137 = por %p135, %p136
      %s139 = sadd.s32 %s138, 1
      %p142 = scmp.eq.s32.totalorder %s20, 1
      %p143 = scmp.ne.s32.totalorder %s138, %s140
      %p144 = scmp.eq.s32.totalorder %s20, 0
      %p145 = por %p143, %p144
      %p146 = scmp.ne.s32.totalorder %s138, %s140
      %p147 = scmp.eq.s32.totalorder %s25, 1
      %p148 = por %p146, %p147
      %p149 = scmp.ne.s32.totalorder %s140, %s141
      %p150 = scmp.eq.s32.totalorder %s25, 0
      %p151 = por %p149, %p150
      %p152 = scmp.ne.s32.totalorder %s140, %s141
      %p153 = scmp.eq.s32.totalorder %s26, 1
      %p154 = por %p152, %p153
      %p156 = scmp.ne.s32.totalorder %s141, %s155
      %p157 = scmp.eq.s32.totalorder %s26, 0
      %p158 = por %p156, %p157
      %s159 = ssub.s32 %s20, %s27
      %p160 = scmp.eq.s32.totalorder %s159, 0
      %s162 = sadd.s32 %s161, 1
      %s163 = scalar_select %p160, %s161, %s162
      %p166 = pneg %p160
      %p167 = scmp.eq.s32.totalorder %s20, 1
      %p168 = por %p166, %p167
      %p169 = scmp.ne.s32.totalorder %s161, %s164
      %p170 = scmp.eq.s32.totalorder %s20, 0
      %p171 = por %p169, %p170
      %p172 = scmp.ne.s32.totalorder %s161, %s164
      %p173 = scmp.eq.s32.totalorder %s25, 1
      %p174 = por %p172, %p173
      %p175 = scmp.ne.s32.totalorder %s164, %s165
      %p176 = scmp.eq.s32.totalorder %s25, 0
      %p177 = por %p175, %p176
      %p178 = scmp.ne.s32.totalorder %s164, %s165
      %p179 = scmp.eq.s32.totalorder %s26, 1
      %p180 = por %p178, %p179
      %p182 = scmp.ne.s32.totalorder %s165, %s181
      %p183 = scmp.eq.s32.totalorder %s26, 0
      %p184 = por %p182, %p183
      %p185 = scmp.le.s32.totalorder 1, %s20
      %p186 = scmp.lt.s32.totalorder %s20, 3
      %p187 = pnand %p185, %p186
      %p188 = pneg %p187
      // Predicated region
      $region9: #{tpu_custom_call.1} parent=5 // pred_check
        _
      $region10: #{tpu_custom_call.1} parent=5 // pred_check_branch
        %190 = sbr.rel (%p187) target = $region12
      $region11: #{tpu_custom_call.1} parent=5 // pred_region
        %s191 = ssub.s32 %s20, 1
        // Predicated region
        $region13: #{tpu_custom_call.1} parent=11 // pred_check
          %p192 = pneg %p67
        $region14: #{tpu_custom_call.1} parent=11 // pred_check_branch
          %194 = sbr.rel (%p192) target = $region16
        $region15: #{tpu_custom_call.1} parent=11 // pred_region
          %s196 = ssub.s32 256, 256
          %197 = vsyncadd [#allocation6], %s196
          %s198 = sshll.u32 [#allocation5], 4
          %s199 = int_to_ptr.vmem [resolvable:$true] %s198
          %204 = dma.hbm_to_vmem [thread:$0]  %s1, 256, %s199, [#allocation6], 128, 128, 8
        $region16: #{tpu_custom_call.1} parent=11 // pred_fallthru
          _
        // Predicated region
        $region17: #{tpu_custom_call.1} parent=11 // pred_check
          %p205 = pneg %p88
        $region18: #{tpu_custom_call.1} parent=11 // pred_check_branch
          %207 = sbr.rel (%p205) target = $region20
        $region19: #{tpu_custom_call.1} parent=11 // pred_region
          %s209 = ssub.s32 2048, 2048
          %210 = vsyncadd [#allocation6], %s209
          %s211 = sshll.u32 [#allocation7], 4
          %s212 = int_to_ptr.vmem [resolvable:$true] %s211
          %217 = dma.hbm_to_vmem [thread:$0]  %s2, 2048, %s212, [#allocation6], 128, 128, 8
        $region20: #{tpu_custom_call.1} parent=11 // pred_fallthru
          _
        // Predicated region
        $region21: #{tpu_custom_call.1} parent=11 // pred_check
          %p218 = pneg %p109
        $region22: #{tpu_custom_call.1} parent=11 // pred_check_branch
          %220 = sbr.rel (%p218) target = $region24
        $region23: #{tpu_custom_call.1} parent=11 // pred_region
          _
        $region24: #{tpu_custom_call.1} parent=11 // pred_fallthru
          _
        // Predicated region
        $region25: #{tpu_custom_call.1} parent=11 // pred_check
          %p221 = pneg %p130
        $region26: #{tpu_custom_call.1} parent=11 // pred_check_branch
          %223 = sbr.rel (%p221) target = $region28
        $region27: #{tpu_custom_call.1} parent=11 // pred_region
          %s225 = ssub.s32 2048, 2048
          %226 = vsyncadd [#allocation9], %s225
          %s227 = sshll.u32 [#allocation8], 4
          %s228 = int_to_ptr.vmem [resolvable:$true] %s227
          %233 = dma.hbm_to_vmem [thread:$0]  %s4, 2048, %s228, [#allocation9], 128, 128, 8
        $region28: #{tpu_custom_call.1} parent=11 // pred_fallthru
          _
        // Predicated region
        $region29: #{tpu_custom_call.1} parent=11 // pred_check
          %p234 = pneg %p151
        $region30: #{tpu_custom_call.1} parent=11 // pred_check_branch
          %236 = sbr.rel (%p234) target = $region32
        $region31: #{tpu_custom_call.1} parent=11 // pred_region
          _
        $region32: #{tpu_custom_call.1} parent=11 // pred_fallthru
          _
      $region12: #{tpu_custom_call.1} parent=5 // pred_fallthru
        _
      %p237 = scmp.lt.s32.totalorder %s20, 2
      // Predicated region
      $region33: #{tpu_custom_call.1} parent=5 // pred_check
        %p238 = pneg %p237
      $region34: #{tpu_custom_call.1} parent=5 // pred_check_branch
        %240 = sbr.rel (%p238) target = $region36
      $region35: #{tpu_custom_call.1} parent=5 // pred_region
        // Predicated region
        $region37: #{tpu_custom_call.1} parent=35 // pred_check
          %p241 = pneg %p40
        $region38: #{tpu_custom_call.1} parent=35 // pred_check_branch
          %243 = sbr.rel (%p241) target = $region40
        $region39: #{tpu_custom_call.1} parent=35 // pred_region
          %s244 = sand.u32 %s30, 1
          %s245 = scalar_lea.sflag [#allocation3], %s244
          %s246 = sand.u32 %s30, 1
          %s247 = smul.addr %s246, 128
          %s248 = scalar_lea.vmem [#allocation2], %s247
          %s249 = smul.u32 8, %s20
          %s251 = ssub.s32 2048, 2048
          %252 = vsyncadd %s245, %s251
          %s253 = smul.addr %s249, 2
          %s254 = smul.addr %s253, 128
          %s255 = scalar_lea.hbm %s0, %s254
          %s256 = sshll.u32 %s248, 4
          %s257 = int_to_ptr.vmem [resolvable:$true] %s256
          %262 = dma.hbm_to_vmem [thread:$0]  %s255, 2048, %s257, %s245, 128, 128, 8
        $region40: #{tpu_custom_call.1} parent=35 // pred_fallthru
          _
      $region36: #{tpu_custom_call.1} parent=5 // pred_fallthru
        _
      %p263 = scmp.le.s32.totalorder 1, %s20
      %p264 = scmp.lt.s32.totalorder %s20, 3
      %p265 = pnand %p263, %p264
      %p266 = pneg %p265
      // Predicated region
      $region41: #{tpu_custom_call.1} parent=5 // pred_check
        _
      $region42: #{tpu_custom_call.1} parent=5 // pred_check_branch
        %268 = sbr.rel (%p265) target = $region44
      $region43: #{tpu_custom_call.1} parent=5 // pred_region
        %s269 = ssub.s32 %s20, 1
        %s270 = sand.u32 %s33, 1
        %s271 = scalar_lea.sflag [#allocation3], %s270
        %s272 = sand.u32 %s33, 1
        %s273 = smul.addr %s272, 128
        %s274 = scalar_lea.vmem [#allocation2], %s273
        // Predicated region
        $region45: #{tpu_custom_call.1} parent=43 // pred_check
          %p275 = pneg %p46
        $region46: #{tpu_custom_call.1} parent=43 // pred_check_branch
          %277 = sbr.rel (%p275) target = $region48
        $region47: #{tpu_custom_call.1} parent=43 // pred_region
          %278 = dma.done %s271, 2048
        $region48: #{tpu_custom_call.1} parent=43 // pred_fallthru
          _
        // Predicated region
        $region49: #{tpu_custom_call.1} parent=43 // pred_check
          %p279 = pneg %p67
        $region50: #{tpu_custom_call.1} parent=43 // pred_check_branch
          %281 = sbr.rel (%p279) target = $region52
        $region51: #{tpu_custom_call.1} parent=43 // pred_region
          %282 = dma.done [#allocation6], 256
        $region52: #{tpu_custom_call.1} parent=43 // pred_fallthru
          _
        // Predicated region
        $region53: #{tpu_custom_call.1} parent=43 // pred_check
          %p283 = pneg %p88
        $region54: #{tpu_custom_call.1} parent=43 // pred_check_branch
          %285 = sbr.rel (%p283) target = $region56
        $region55: #{tpu_custom_call.1} parent=43 // pred_region
          %286 = dma.done [#allocation6], 2048
        $region56: #{tpu_custom_call.1} parent=43 // pred_fallthru
          _
        // Predicated region
        $region57: #{tpu_custom_call.1} parent=43 // pred_check
          %p287 = pneg %p130
        $region58: #{tpu_custom_call.1} parent=43 // pred_check_branch
          %289 = sbr.rel (%p287) target = $region60
        $region59: #{tpu_custom_call.1} parent=43 // pred_region
          %290 = dma.done [#allocation9], 2048
        $region60: #{tpu_custom_call.1} parent=43 // pred_fallthru
          _
        %s291 = sand.u32 %s33, 1
        %s292 = scalar_lea.sflag [#allocation3], %s291
        %s293 = sand.u32 %s33, 1
        %s294 = smul.addr %s293, 128
        %s295 = scalar_lea.vmem [#allocation2], %s294
        %p296 = pneg %p46
        %p297 = pneg %p43
        %p298 = pneg %p67
        %p299 = pneg %p64
        %p300 = pneg %p88
        %p301 = pneg %p85
        %p302 = pneg %p109
        %p303 = pneg %p106
        %p304 = pneg %p130
        %p305 = pneg %p127
        %p306 = pneg %p151
        %p307 = pneg %p148
        %p308 = pneg %p177
        %p309 = pneg %p174
        %s310 = sand.u32 %s164, 1
        %s311 = scalar_lea.sflag [#allocation4], %s310
        %s312 = sand.u32 %s164, 1
        %s313 = smul.addr %s312, 128
        %s314 = scalar_lea.vmem [#allocation10], %s313
        %s315 = smul.u32 8, %s25
        %s316 = smul.u32 8, %s25
        %v317 = vld [vmem:[%s274] sm:$0xff]
        %v318 = vld [vmem:[%s274 + $0x8] sm:$0xff]
        %v319 = vld [vmem:[%s274 + $0x10] sm:$0xff]
        %v320 = vld [vmem:[%s274 + $0x18] sm:$0xff]
        %v321 = vld [vmem:[%s274 + $0x20] sm:$0xff]
        %v322 = vld [vmem:[%s274 + $0x28] sm:$0xff]
        %v323 = vld [vmem:[%s274 + $0x30] sm:$0xff]
        %v324 = vld [vmem:[%s274 + $0x38] sm:$0xff]
        %v325 = vld [vmem:[%s274 + $0x40] sm:$0xff]
        %v326 = vld [vmem:[%s274 + $0x48] sm:$0xff]
        %v327 = vld [vmem:[%s274 + $0x50] sm:$0xff]
        %v328 = vld [vmem:[%s274 + $0x58] sm:$0xff]
        %v329 = vld [vmem:[%s274 + $0x60] sm:$0xff]
        %v330 = vld [vmem:[%s274 + $0x68] sm:$0xff]
        %v331 = vld [vmem:[%s274 + $0x70] sm:$0xff]
        %v332 = vld [vmem:[%s274 + $0x78] sm:$0xff]
        %v333 = vld [vmem:[#allocation5] sm:$0xff]
        %v334 = vld [vmem:[#allocation5 + $0x8] sm:$0xff]
        %v335 = vld [vmem:[#allocation7] sm:$0xff]
        %v336 = vld [vmem:[#allocation7 + $0x8] sm:$0xff]
        %v337 = vld [vmem:[#allocation7 + $0x10] sm:$0xff]
        %v338 = vld [vmem:[#allocation7 + $0x18] sm:$0xff]
        %v339 = vld [vmem:[#allocation7 + $0x20] sm:$0xff]
        %v340 = vld [vmem:[#allocation7 + $0x28] sm:$0xff]
        %v341 = vld [vmem:[#allocation7 + $0x30] sm:$0xff]
        %v342 = vld [vmem:[#allocation7 + $0x38] sm:$0xff]
        %v343 = vld [vmem:[#allocation7 + $0x40] sm:$0xff]
        %v344 = vld [vmem:[#allocation7 + $0x48] sm:$0xff]
        %v345 = vld [vmem:[#allocation7 + $0x50] sm:$0xff]
        %v346 = vld [vmem:[#allocation7 + $0x58] sm:$0xff]
        %v347 = vld [vmem:[#allocation7 + $0x60] sm:$0xff]
        %v348 = vld [vmem:[#allocation7 + $0x68] sm:$0xff]
        %v349 = vld [vmem:[#allocation7 + $0x70] sm:$0xff]
        %v350 = vld [vmem:[#allocation7 + $0x78] sm:$0xff]
        %v351 = vld [vmem:[#allocation8] sm:$0xff]
        %v352 = vld [vmem:[#allocation8 + $0x8] sm:$0xff]
        %v353 = vld [vmem:[#allocation8 + $0x10] sm:$0xff]
        %v354 = vld [vmem:[#allocation8 + $0x18] sm:$0xff]
        %v355 = vld [vmem:[#allocation8 + $0x20] sm:$0xff]
        %v356 = vld [vmem:[#allocation8 + $0x28] sm:$0xff]
        %v357 = vld [vmem:[#allocation8 + $0x30] sm:$0xff]
        %v358 = vld [vmem:[#allocation8 + $0x38] sm:$0xff]
        %v359 = vld [vmem:[#allocation8 + $0x40] sm:$0xff]
        %v360 = vld [vmem:[#allocation8 + $0x48] sm:$0xff]
        %v361 = vld [vmem:[#allocation8 + $0x50] sm:$0xff]
        %v362 = vld [vmem:[#allocation8 + $0x58] sm:$0xff]
        %v363 = vld [vmem:[#allocation8 + $0x60] sm:$0xff]
        %v364 = vld [vmem:[#allocation8 + $0x68] sm:$0xff]
        %v365 = vld [vmem:[#allocation8 + $0x70] sm:$0xff]
        %v366 = vld [vmem:[#allocation8 + $0x78] sm:$0xff]
        %367 = vxpose.xlu0.b32.start [1/16] %v317, 128
        %368 = vxpose.xlu0.b32.cont [2/16] %v318, 128
        %369 = vxpose.xlu0.b32.cont [3/16] 0.0, 128
        %370 = vxpose.xlu0.b32.cont [4/16] 0.0, 128
        %371 = vxpose.xlu0.b32.cont [5/16] 0.0, 128
        %372 = vxpose.xlu0.b32.cont [6/16] 0.0, 128
        %373 = vxpose.xlu0.b32.cont [7/16] 0.0, 128
        %374 = vxpose.xlu0.b32.cont [8/16] 0.0, 128
        %375 = vxpose.xlu0.b32.cont [9/16] 0.0, 128
        %376 = vxpose.xlu0.b32.cont [10/16] 0.0, 128
        %377 = vxpose.xlu0.b32.cont [11/16] 0.0, 128
        %378 = vxpose.xlu0.b32.cont [12/16] 0.0, 128
        %379 = vxpose.xlu0.b32.cont [13/16] 0.0, 128
        %380 = vxpose.xlu0.b32.cont [14/16] 0.0, 128
        %381 = vxpose.xlu0.b32.cont [15/16] 0.0, 128
        %382 = vxpose.xlu0.b32.end [16/16] 0.0, 128
        %v383 = vpop.trf.xlu0
        %v384 = vpop.trf.xlu0
        %v385 = vpop.trf.xlu0
        %v386 = vpop.trf.xlu0
        %v387 = vpop.trf.xlu0
        %v388 = vpop.trf.xlu0
        %v389 = vpop.trf.xlu0
        %v390 = vpop.trf.xlu0
        %v391 = vpop.trf.xlu0
        %v392 = vpop.trf.xlu0
        %v393 = vpop.trf.xlu0
        %v394 = vpop.trf.xlu0
        %v395 = vpop.trf.xlu0
        %v396 = vpop.trf.xlu0
        %v397 = vpop.trf.xlu0
        %v398 = vpop.trf.xlu0
        %399 = vxpose.xlu0.b32.start [1/16] %v319, 128
        %400 = vxpose.xlu0.b32.cont [2/16] %v320, 128
        %401 = vxpose.xlu0.b32.cont [3/16] 0.0, 128
        %402 = vxpose.xlu0.b32.cont [4/16] 0.0, 128
        %403 = vxpose.xlu0.b32.cont [5/16] 0.0, 128
        %404 = vxpose.xlu0.b32.cont [6/16] 0.0, 128
        %405 = vxpose.xlu0.b32.cont [7/16] 0.0, 128
        %406 = vxpose.xlu0.b32.cont [8/16] 0.0, 128
        %407 = vxpose.xlu0.b32.cont [9/16] 0.0, 128
        %408 = vxpose.xlu0.b32.cont [10/16] 0.0, 128
        %409 = vxpose.xlu0.b32.cont [11/16] 0.0, 128
        %410 = vxpose.xlu0.b32.cont [12/16] 0.0, 128
        %411 = vxpose.xlu0.b32.cont [13/16] 0.0, 128
        %412 = vxpose.xlu0.b32.cont [14/16] 0.0, 128
        %413 = vxpose.xlu0.b32.cont [15/16] 0.0, 128
        %414 = vxpose.xlu0.b32.end [16/16] 0.0, 128
        %v415 = vpop.trf.xlu0
        %v416 = vpop.trf.xlu0
        %v417 = vpop.trf.xlu0
        %v418 = vpop.trf.xlu0
        %v419 = vpop.trf.xlu0
        %v420 = vpop.trf.xlu0
        %v421 = vpop.trf.xlu0
        %v422 = vpop.trf.xlu0
        %v423 = vpop.trf.xlu0
        %v424 = vpop.trf.xlu0
        %v425 = vpop.trf.xlu0
        %v426 = vpop.trf.xlu0
        %v427 = vpop.trf.xlu0
        %v428 = vpop.trf.xlu0
        %v429 = vpop.trf.xlu0
        %v430 = vpop.trf.xlu0
        %431 = vxpose.xlu0.b32.start [1/16] %v321, 128
        %432 = vxpose.xlu0.b32.cont [2/16] %v322, 128
        %433 = vxpose.xlu0.b32.cont [3/16] 0.0, 128
        %434 = vxpose.xlu0.b32.cont [4/16] 0.0, 128
        %435 = vxpose.xlu0.b32.cont [5/16] 0.0, 128
        %436 = vxpose.xlu0.b32.cont [6/16] 0.0, 128
        %437 = vxpose.xlu0.b32.cont [7/16] 0.0, 128
        %438 = vxpose.xlu0.b32.cont [8/16] 0.0, 128
        %439 = vxpose.xlu0.b32.cont [9/16] 0.0, 128
        %440 = vxpose.xlu0.b32.cont [10/16] 0.0, 128
        %441 = vxpose.xlu0.b32.cont [11/16] 0.0, 128
        %442 = vxpose.xlu0.b32.cont [12/16] 0.0, 128
        %443 = vxpose.xlu0.b32.cont [13/16] 0.0, 128
        %444 = vxpose.xlu0.b32.cont [14/16] 0.0, 128
        %445 = vxpose.xlu0.b32.cont [15/16] 0.0, 128
        %446 = vxpose.xlu0.b32.end [16/16] 0.0, 128
        %v447 = vpop.trf.xlu0
        %v448 = vpop.trf.xlu0
        %v449 = vpop.trf.xlu0
        %v450 = vpop.trf.xlu0
        %v451 = vpop.trf.xlu0
        %v452 = vpop.trf.xlu0
        %v453 = vpop.trf.xlu0
        %v454 = vpop.trf.xlu0
        %v455 = vpop.trf.xlu0
        %v456 = vpop.trf.xlu0
        %v457 = vpop.trf.xlu0
        %v458 = vpop.trf.xlu0
        %v459 = vpop.trf.xlu0
        %v460 = vpop.trf.xlu0
        %v461 = vpop.trf.xlu0
        %v462 = vpop.trf.xlu0
        %463 = vxpose.xlu0.b32.start [1/16] %v323, 128
        %464 = vxpose.xlu0.b32.cont [2/16] %v324, 128
        %465 = vxpose.xlu0.b32.cont [3/16] 0.0, 128
        %466 = vxpose.xlu0.b32.cont [4/16] 0.0, 128
        %467 = vxpose.xlu0.b32.cont [5/16] 0.0, 128
        %468 = vxpose.xlu0.b32.cont [6/16] 0.0, 128
        %469 = vxpose.xlu0.b32.cont [7/16] 0.0, 128
        %470 = vxpose.xlu0.b32.cont [8/16] 0.0, 128
        %471 = vxpose.xlu0.b32.cont [9/16] 0.0, 128
        %472 = vxpose.xlu0.b32.cont [10/16] 0.0, 128
        %473 = vxpose.xlu0.b32.cont [11/16] 0.0, 128
        %474 = vxpose.xlu0.b32.cont [12/16] 0.0, 128
        %475 = vxpose.xlu0.b32.cont [13/16] 0.0, 128
        %476 = vxpose.xlu0.b32.cont [14/16] 0.0, 128
        %477 = vxpose.xlu0.b32.cont [15/16] 0.0, 128
        %478 = vxpose.xlu0.b32.end [16/16] 0.0, 128
        %v479 = vpop.trf.xlu0
        %v480 = vpop.trf.xlu0
        %v481 = vpop.trf.xlu0
        %v482 = vpop.trf.xlu0
        %v483 = vpop.trf.xlu0
        %v484 = vpop.trf.xlu0
        %v485 = vpop.trf.xlu0
        %v486 = vpop.trf.xlu0
        %v487 = vpop.trf.xlu0
        %v488 = vpop.trf.xlu0
        %v489 = vpop.trf.xlu0
        %v490 = vpop.trf.xlu0
        %v491 = vpop.trf.xlu0
        %v492 = vpop.trf.xlu0
        %v493 = vpop.trf.xlu0
        %v494 = vpop.trf.xlu0
        %495 = vxpose.xlu0.b32.start [1/16] %v325, 128
        %496 = vxpose.xlu0.b32.cont [2/16] %v326, 128
        %497 = vxpose.xlu0.b32.cont [3/16] 0.0, 128
        %498 = vxpose.xlu0.b32.cont [4/16] 0.0, 128
        %499 = vxpose.xlu0.b32.cont [5/16] 0.0, 128
        %500 = vxpose.xlu0.b32.cont [6/16] 0.0, 128
        %501 = vxpose.xlu0.b32.cont [7/16] 0.0, 128
        %502 = vxpose.xlu0.b32.cont [8/16] 0.0, 128
        %503 = vxpose.xlu0.b32.cont [9/16] 0.0, 128
        %504 = vxpose.xlu0.b32.cont [10/16] 0.0, 128
        %505 = vxpose.xlu0.b32.cont [11/16] 0.0, 128
        %506 = vxpose.xlu0.b32.cont [12/16] 0.0, 128
        %507 = vxpose.xlu0.b32.cont [13/16] 0.0, 128
        %508 = vxpose.xlu0.b32.cont [14/16] 0.0, 128
        %509 = vxpose.xlu0.b32.cont [15/16] 0.0, 128
        %510 = vxpose.xlu0.b32.end [16/16] 0.0, 128
        %v511 = vpop.trf.xlu0
        %v512 = vpop.trf.xlu0
        %v513 = vpop.trf.xlu0
        %v514 = vpop.trf.xlu0
        %v515 = vpop.trf.xlu0
        %v516 = vpop.trf.xlu0
        %v517 = vpop.trf.xlu0
        %v518 = vpop.trf.xlu0
        %v519 = vpop.trf.xlu0
        %v520 = vpop.trf.xlu0
        %v521 = vpop.trf.xlu0
        %v522 = vpop.trf.xlu0
        %v523 = vpop.trf.xlu0
        %v524 = vpop.trf.xlu0
        %v525 = vpop.trf.xlu0
        %v526 = vpop.trf.xlu0
        %527 = vxpose.xlu0.b32.start [1/16] %v327, 128
        %528 = vxpose.xlu0.b32.cont [2/16] %v328, 128
        %529 = vxpose.xlu0.b32.cont [3/16] 0.0, 128
        %530 = vxpose.xlu0.b32.cont [4/16] 0.0, 128
        %531 = vxpose.xlu0.b32.cont [5/16] 0.0, 128
        %532 = vxpose.xlu0.b32.cont [6/16] 0.0, 128
        %533 = vxpose.xlu0.b32.cont [7/16] 0.0, 128
        %534 = vxpose.xlu0.b32.cont [8/16] 0.0, 128
        %535 = vxpose.xlu0.b32.cont [9/16] 0.0, 128
        %536 = vxpose.xlu0.b32.cont [10/16] 0.0, 128
        %537 = vxpose.xlu0.b32.cont [11/16] 0.0, 128
        %538 = vxpose.xlu0.b32.cont [12/16] 0.0, 128
        %539 = vxpose.xlu0.b32.cont [13/16] 0.0, 128
        %540 = vxpose.xlu0.b32.cont [14/16] 0.0, 128
        %541 = vxpose.xlu0.b32.cont [15/16] 0.0, 128
        %542 = vxpose.xlu0.b32.end [16/16] 0.0, 128
        %v543 = vpop.trf.xlu0
        %v544 = vpop.trf.xlu0
        %v545 = vpop.trf.xlu0
        %v546 = vpop.trf.xlu0
        %v547 = vpop.trf.xlu0
        %v548 = vpop.trf.xlu0
        %v549 = vpop.trf.xlu0
        %v550 = vpop.trf.xlu0
        %v551 = vpop.trf.xlu0
        %v552 = vpop.trf.xlu0
        %v553 = vpop.trf.xlu0
        %v554 = vpop.trf.xlu0
        %v555 = vpop.trf.xlu0
        %v556 = vpop.trf.xlu0
        %v557 = vpop.trf.xlu0
        %v558 = vpop.trf.xlu0
        %559 = vxpose.xlu0.b32.start [1/16] %v329, 128
        %560 = vxpose.xlu0.b32.cont [2/16] %v330, 128
        %561 = vxpose.xlu0.b32.cont [3/16] 0.0, 128
        %562 = vxpose.xlu0.b32.cont [4/16] 0.0, 128
        %563 = vxpose.xlu0.b32.cont [5/16] 0.0, 128
        %564 = vxpose.xlu0.b32.cont [6/16] 0.0, 128
        %565 = vxpose.xlu0.b32.cont [7/16] 0.0, 128
        %566 = vxpose.xlu0.b32.cont [8/16] 0.0, 128
        %567 = vxpose.xlu0.b32.cont [9/16] 0.0, 128
        %568 = vxpose.xlu0.b32.cont [10/16] 0.0, 128
        %569 = vxpose.xlu0.b32.cont [11/16] 0.0, 128
        %570 = vxpose.xlu0.b32.cont [12/16] 0.0, 128
        %571 = vxpose.xlu0.b32.cont [13/16] 0.0, 128
        %572 = vxpose.xlu0.b32.cont [14/16] 0.0, 128
        %573 = vxpose.xlu0.b32.cont [15/16] 0.0, 128
        %574 = vxpose.xlu0.b32.end [16/16] 0.0, 128
        %v575 = vpop.trf.xlu0
        %v576 = vpop.trf.xlu0
        %v577 = vpop.trf.xlu0
        %v578 = vpop.trf.xlu0
        %v579 = vpop.trf.xlu0
        %v580 = vpop.trf.xlu0
        %v581 = vpop.trf.xlu0
        %v582 = vpop.trf.xlu0
        %v583 = vpop.trf.xlu0
        %v584 = vpop.trf.xlu0
        %v585 = vpop.trf.xlu0
        %v586 = vpop.trf.xlu0
        %v587 = vpop.trf.xlu0
        %v588 = vpop.trf.xlu0
        %v589 = vpop.trf.xlu0
        %v590 = vpop.trf.xlu0
        %591 = vxpose.xlu0.b32.start [1/16] %v331, 128
        %592 = vxpose.xlu0.b32.cont [2/16] %v332, 128
        %593 = vxpose.xlu0.b32.cont [3/16] 0.0, 128
        %594 = vxpose.xlu0.b32.cont [4/16] 0.0, 128
        %595 = vxpose.xlu0.b32.cont [5/16] 0.0, 128
        %596 = vxpose.xlu0.b32.cont [6/16] 0.0, 128
        %597 = vxpose.xlu0.b32.cont [7/16] 0.0, 128
        %598 = vxpose.xlu0.b32.cont [8/16] 0.0, 128
        %599 = vxpose.xlu0.b32.cont [9/16] 0.0, 128
        %600 = vxpose.xlu0.b32.cont [10/16] 0.0, 128
        %601 = vxpose.xlu0.b32.cont [11/16] 0.0, 128
        %602 = vxpose.xlu0.b32.cont [12/16] 0.0, 128
        %603 = vxpose.xlu0.b32.cont [13/16] 0.0, 128
        %604 = vxpose.xlu0.b32.cont [14/16] 0.0, 128
        %605 = vxpose.xlu0.b32.cont [15/16] 0.0, 128
        %606 = vxpose.xlu0.b32.end [16/16] 0.0, 128
        %v607 = vpop.trf.xlu0
        %v608 = vpop.trf.xlu0
        %v609 = vpop.trf.xlu0
        %v610 = vpop.trf.xlu0
        %v611 = vpop.trf.xlu0
        %v612 = vpop.trf.xlu0
        %v613 = vpop.trf.xlu0
        %v614 = vpop.trf.xlu0
        %v615 = vpop.trf.xlu0
        %v616 = vpop.trf.xlu0
        %v617 = vpop.trf.xlu0
        %v618 = vpop.trf.xlu0
        %v619 = vpop.trf.xlu0
        %v620 = vpop.trf.xlu0
        %v621 = vpop.trf.xlu0
        %v622 = vpop.trf.xlu0
        %vm623 = vcmask 130048
        %v625 = vsel %vm623, %v383, 0
        %v628 = vsel %vm623, %v384, 0
        %v631 = vsel %vm623, %v385, 0
        %v634 = vsel %vm623, %v386, 0
        %v637 = vsel %vm623, %v387, 0
        %v640 = vsel %vm623, %v388, 0
        %v643 = vsel %vm623, %v389, 0
        %v646 = vsel %vm623, %v390, 0
        %v649 = vsel %vm623, %v391, 0
        %v652 = vsel %vm623, %v392, 0
        %v655 = vsel %vm623, %v393, 0
        %v658 = vsel %vm623, %v394, 0
        %v661 = vsel %vm623, %v395, 0
        %v664 = vsel %vm623, %v396, 0
        %v667 = vsel %vm623, %v397, 0
        %v670 = vsel %vm623, %v398, 0
        %v673 = vsel %vm623, %v415, 0
        %v676 = vsel %vm623, %v416, 0
        %v679 = vsel %vm623, %v417, 0
        %v682 = vsel %vm623, %v418, 0
        %v685 = vsel %vm623, %v419, 0
        %v688 = vsel %vm623, %v420, 0
        %v691 = vsel %vm623, %v421, 0
        %v694 = vsel %vm623, %v422, 0
        %v697 = vsel %vm623, %v423, 0
        %v700 = vsel %vm623, %v424, 0
        %v703 = vsel %vm623, %v425, 0
        %v706 = vsel %vm623, %v426, 0
        %v709 = vsel %vm623, %v427, 0
        %v712 = vsel %vm623, %v428, 0
        %v715 = vsel %vm623, %v429, 0
        %v718 = vsel %vm623, %v430, 0
        %v721 = vsel %vm623, %v447, 0
        %v724 = vsel %vm623, %v448, 0
        %v727 = vsel %vm623, %v449, 0
        %v730 = vsel %vm623, %v450, 0
        %v733 = vsel %vm623, %v451, 0
        %v736 = vsel %vm623, %v452, 0
        %v739 = vsel %vm623, %v453, 0
        %v742 = vsel %vm623, %v454, 0
        %v745 = vsel %vm623, %v455, 0
        %v748 = vsel %vm623, %v456, 0
        %v751 = vsel %vm623, %v457, 0
        %v754 = vsel %vm623, %v458, 0
        %v757 = vsel %vm623, %v459, 0
        %v760 = vsel %vm623, %v460, 0
        %v763 = vsel %vm623, %v461, 0
        %v766 = vsel %vm623, %v462, 0
        %v769 = vsel %vm623, %v479, 0
        %v772 = vsel %vm623, %v480, 0
        %v775 = vsel %vm623, %v481, 0
        %v778 = vsel %vm623, %v482, 0
        %v781 = vsel %vm623, %v483, 0
        %v784 = vsel %vm623, %v484, 0
        %v787 = vsel %vm623, %v485, 0
        %v790 = vsel %vm623, %v486, 0
        %v793 = vsel %vm623, %v487, 0
        %v796 = vsel %vm623, %v488, 0
        %v799 = vsel %vm623, %v489, 0
        %v802 = vsel %vm623, %v490, 0
        %v805 = vsel %vm623, %v491, 0
        %v808 = vsel %vm623, %v492, 0
        %v811 = vsel %vm623, %v493, 0
        %v814 = vsel %vm623, %v494, 0
        %v817 = vsel %vm623, %v511, 0
        %v820 = vsel %vm623, %v512, 0
        %v823 = vsel %vm623, %v513, 0
        %v826 = vsel %vm623, %v514, 0
        %v829 = vsel %vm623, %v515, 0
        %v832 = vsel %vm623, %v516, 0
        %v835 = vsel %vm623, %v517, 0
        %v838 = vsel %vm623, %v518, 0
        %v841 = vsel %vm623, %v519, 0
        %v844 = vsel %vm623, %v520, 0
        %v847 = vsel %vm623, %v521, 0
        %v850 = vsel %vm623, %v522, 0
        %v853 = vsel %vm623, %v523, 0
        %v856 = vsel %vm623, %v524, 0
        %v859 = vsel %vm623, %v525, 0
        %v862 = vsel %vm623, %v526, 0
        %v865 = vsel %vm623, %v543, 0
        %v868 = vsel %vm623, %v544, 0
        %v871 = vsel %vm623, %v545, 0
        %v874 = vsel %vm623, %v546, 0
        %v877 = vsel %vm623, %v547, 0
        %v880 = vsel %vm623, %v548, 0
        %v883 = vsel %vm623, %v549, 0
        %v886 = vsel %vm623, %v550, 0
        %v889 = vsel %vm623, %v551, 0
        %v892 = vsel %vm623, %v552, 0
        %v895 = vsel %vm623, %v553, 0
        %v898 = vsel %vm623, %v554, 0
        %v901 = vsel %vm623, %v555, 0
        %v904 = vsel %vm623, %v556, 0
        %v907 = vsel %vm623, %v557, 0
        %v910 = vsel %vm623, %v558, 0
        %v913 = vsel %vm623, %v575, 0
        %v916 = vsel %vm623, %v576, 0
        %v919 = vsel %vm623, %v577, 0
        %v922 = vsel %vm623, %v578, 0
        %v925 = vsel %vm623, %v579, 0
        %v928 = vsel %vm623, %v580, 0
        %v931 = vsel %vm623, %v581, 0
        %v934 = vsel %vm623, %v582, 0
        %v937 = vsel %vm623, %v583, 0
        %v940 = vsel %vm623, %v584, 0
        %v943 = vsel %vm623, %v585, 0
        %v946 = vsel %vm623, %v586, 0
        %v949 = vsel %vm623, %v587, 0
        %v952 = vsel %vm623, %v588, 0
        %v955 = vsel %vm623, %v589, 0
        %v958 = vsel %vm623, %v590, 0
        %v961 = vsel %vm623, %v607, 0
        %v964 = vsel %vm623, %v608, 0
        %v967 = vsel %vm623, %v609, 0
        %v970 = vsel %vm623, %v610, 0
        %v973 = vsel %vm623, %v611, 0
        %v976 = vsel %vm623, %v612, 0
        %v979 = vsel %vm623, %v613, 0
        %v982 = vsel %vm623, %v614, 0
        %v985 = vsel %vm623, %v615, 0
        %v988 = vsel %vm623, %v616, 0
        %v991 = vsel %vm623, %v617, 0
        %v994 = vsel %vm623, %v618, 0
        %v997 = vsel %vm623, %v619, 0
        %v1000 = vsel %vm623, %v620, 0
        %v1003 = vsel %vm623, %v621, 0
        %v1006 = vsel %vm623, %v622, 0
        %v1009 = vsel %vm623, %v333, 0
        %v1012 = vsel %vm623, %v334, 0
        %1014 = vmatprep.subr.mxu0 0.0
        %1015 = vmatpush1.xpose.msra.mxu0 %v1009
        %1016 = vmatprep.subr.mxu0 0.0
        %1017 = vmatpush1.xpose.msra.mxu0 %v1012
        %1018 = vmatprep.subr.mxu0 0.0
        %1019 = vmatpush1.xpose.msra.mxu0 0.0
        %1020 = vmatprep.subr.mxu0 0.0
        %1021 = vmatpush1.xpose.msra.mxu0 0.0
        %1022 = vmatprep.subr.mxu0 0.0
        %1023 = vmatpush1.xpose.msra.mxu0 0.0
        %1024 = vmatprep.subr.mxu0 0.0
        %1025 = vmatpush1.xpose.msra.mxu0 0.0
        %1026 = vmatprep.subr.mxu0 0.0
        %1027 = vmatpush1.xpose.msra.mxu0 0.0
        %1028 = vmatprep.subr.mxu0 0.0
        %1029 = vmatpush1.xpose.msra.mxu0 0.0
        %1030 = vmatprep.subr.mxu0 0.0
        %1031 = vmatpush1.xpose.msra.mxu0 0.0
        %1032 = vmatprep.subr.mxu0 0.0
        %1033 = vmatpush1.xpose.msra.mxu0 0.0
        %1034 = vmatprep.subr.mxu0 0.0
        %1035 = vmatpush1.xpose.msra.mxu0 0.0
        %1036 = vmatprep.subr.mxu0 0.0
        %1037 = vmatpush1.xpose.msra.mxu0 0.0
        %1038 = vmatprep.subr.mxu0 0.0
        %1039 = vmatpush1.xpose.msra.mxu0 0.0
        %1040 = vmatprep.subr.mxu0 0.0
        %1041 = vmatpush1.xpose.msra.mxu0 0.0
        %1042 = vmatprep.subr.mxu0 0.0
        %1043 = vmatpush1.xpose.msra.mxu0 0.0
        %1044 = vmatprep.subr.mxu0 0.0
        %1045 = vmatpush1.xpose.msra.mxu0 0.0
        %1046 = vmatprep.subr.mxu0 0.0
        %1047 = vmatpush1.xpose.msra.mxu0 0.0
        %1048 = vmatprep.subr.mxu0 0.0
        %1049 = vmatpush1.xpose.msra.mxu0 0.0
        %1050 = vmatprep.subr.mxu0 0.0
        %1051 = vmatpush1.xpose.msra.mxu0 0.0
        %1052 = vmatprep.subr.mxu0 0.0
        %1053 = vmatpush1.xpose.msra.mxu0 0.0
        %1054 = vmatprep.subr.mxu0 0.0
        %1055 = vmatpush1.xpose.msra.mxu0 0.0
        %1056 = vmatprep.subr.mxu0 0.0
        %1057 = vmatpush1.xpose.msra.mxu0 0.0
        %1058 = vmatprep.subr.mxu0 0.0
        %1059 = vmatpush1.xpose.msra.mxu0 0.0
        %1060 = vmatprep.subr.mxu0 0.0
        %1061 = vmatpush1.xpose.msra.mxu0 0.0
        %1062 = vmatprep.subr.mxu0 0.0
        %1063 = vmatpush1.xpose.msra.mxu0 0.0
        %1064 = vmatprep.subr.mxu0 0.0
        %1065 = vmatpush1.xpose.msra.mxu0 0.0
        %1066 = vmatprep.subr.mxu0 0.0
        %1067 = vmatpush1.xpose.msra.mxu0 0.0
        %1068 = vmatprep.subr.mxu0 0.0
        %1069 = vmatpush1.xpose.msra.mxu0 0.0
        %1070 = vmatprep.subr.mxu0 0.0
        %1071 = vmatpush1.xpose.msra.mxu0 0.0
        %1072 = vmatprep.subr.mxu0 0.0
        %1073 = vmatpush1.xpose.msra.mxu0 0.0
        %1074 = vmatprep.subr.mxu0 0.0
        %1075 = vmatpush1.xpose.msra.mxu0 0.0
        %1076 = vmatprep.subr.mxu0 0.0
        %1077 = vmatpush1.xpose.msra.mxu0 0.0
        %1078 = vmatprep.mubr.f32.mxu0 0.0
        %1079 = vmatmul.mubr.f32.gmra.mrb[0].mxu0 %v625
        %v1080 = vpop.f32.mrb[0].mxu0
        %v1081 = vadd.f32 0.0, %v1080
        %v1082 = vpop.f32.mrb[0].mxu0
        %1083 = vmatprep.mubr.f32.mxu0 0.0
        %1084 = vmatmul.mubr.f32.gmra.mrb[0].mxu0 %v628
        %v1085 = vpop.f32.mrb[0].mxu0
        %v1086 = vadd.f32 0.0, %v1085
        %v1087 = vpop.f32.mrb[0].mxu0
        %1088 = vmatprep.mubr.f32.mxu0 0.0
        %1089 = vmatmul.mubr.f32.gmra.mrb[0].mxu0 %v631
        %v1090 = vpop.f32.mrb[0].mxu0
        %v1091 = vadd.f32 0.0, %v1090
        %v1092 = vpop.f32.mrb[0].mxu0
        %1093 = vmatprep.mubr.f32.mxu0 0.0
        %1094 = vmatmul.mubr.f32.gmra.mrb[0].mxu0 %v634
        %v1095 = vpop.f32.mrb[0].mxu0
        %v1096 = vadd.f32 0.0, %v1095
        %v1097 = vpop.f32.mrb[0].mxu0
        %1098 = vmatprep.mubr.f32.mxu0 0.0
        %1099 = vmatmul.mubr.f32.gmra.mrb[0].mxu0 %v637
        %v1100 = vpop.f32.mrb[0].mxu0
        %v1101 = vadd.f32 0.0, %v1100
        %v1102 = vpop.f32.mrb[0].mxu0
        %1103 = vmatprep.mubr.f32.mxu0 0.0
        %1104 = vmatmul.mubr.f32.gmra.mrb[0].mxu0 %v640
        %v1105 = vpop.f32.mrb[0].mxu0
        %v1106 = vadd.f32 0.0, %v1105
        %v1107 = vpop.f32.mrb[0].mxu0
        %1108 = vmatprep.mubr.f32.mxu0 0.0
        %1109 = vmatmul.mubr.f32.gmra.mrb[0].mxu0 %v643
        %v1110 = vpop.f32.mrb[0].mxu0
        %v1111 = vadd.f32 0.0, %v1110
        %v1112 = vpop.f32.mrb[0].mxu0
        %1113 = vmatprep.mubr.f32.mxu0 0.0
        %1114 = vmatmul.mubr.f32.gmra.mrb[0].mxu0 %v646
        %v1115 = vpop.f32.mrb[0].mxu0
        %v1116 = vadd.f32 0.0, %v1115
        %v1117 = vpop.f32.mrb[0].mxu0
        %1118 = vmatprep.mubr.f32.mxu0 0.0
        %1119 = vmatmul.mubr.f32.gmra.mrb[0].mxu0 %v649
        %v1120 = vpop.f32.mrb[0].mxu0
        %v1121 = vadd.f32 0.0, %v1120
        %v1122 = vpop.f32.mrb[0].mxu0
        %1123 = vmatprep.mubr.f32.mxu0 0.0
        %1124 = vmatmul.mubr.f32.gmra.mrb[0].mxu0 %v652
        %v1125 = vpop.f32.mrb[0].mxu0
        %v1126 = vadd.f32 0.0, %v1125
        %v1127 = vpop.f32.mrb[0].mxu0
        %1128 = vmatprep.mubr.f32.mxu0 0.0
        %1129 = vmatmul.mubr.f32.gmra.mrb[0].mxu0 %v655
        %v1130 = vpop.f32.mrb[0].mxu0
        %v1131 = vadd.f32 0.0, %v1130
        %v1132 = vpop.f32.mrb[0].mxu0
        %1133 = vmatprep.mubr.f32.mxu0 0.0
        %1134 = vmatmul.mubr.f32.gmra.mrb[0].mxu0 %v658
        %v1135 = vpop.f32.mrb[0].mxu0
        %v1136 = vadd.f32 0.0, %v1135
        %v1137 = vpop.f32.mrb[0].mxu0
        %1138 = vmatprep.mubr.f32.mxu0 0.0
        %1139 = vmatmul.mubr.f32.gmra.mrb[0].mxu0 %v661
        %v1140 = vpop.f32.mrb[0].mxu0
        %v1141 = vadd.f32 0.0, %v1140
        %v1142 = vpop.f32.mrb[0].mxu0
        %1143 = vmatprep.mubr.f32.mxu0 0.0
        %1144 = vmatmul.mubr.f32.gmra.mrb[0].mxu0 %v664
        %v1145 = vpop.f32.mrb[0].mxu0
        %v1146 = vadd.f32 0.0, %v1145
        %v1147 = vpop.f32.mrb[0].mxu0
        %1148 = vmatprep.mubr.f32.mxu0 0.0
        %1149 = vmatmul.mubr.f32.gmra.mrb[0].mxu0 %v667
        %v1150 = vpop.f32.mrb[0].mxu0
        %v1151 = vadd.f32 0.0, %v1150
        %v1152 = vpop.f32.mrb[0].mxu0
        %1153 = vmatprep.mubr.f32.mxu0 0.0
        %1154 = vmatmul.mubr.f32.gmra.mrb[0].mxu0 %v670
        %v1155 = vpop.f32.mrb[0].mxu0
        %v1156 = vadd.f32 0.0, %v1155
        %v1157 = vpop.f32.mrb[0].mxu0
        %1158 = vmatprep.mubr.f32.mxu0 0.0
        %1159 = vmatmul.mubr.f32.gmra.mrb[0].mxu0 %v673
        %v1160 = vpop.f32.mrb[0].mxu0
        %v1161 = vadd.f32 0.0, %v1160
        %v1162 = vpop.f32.mrb[0].mxu0
        %1163 = vmatprep.mubr.f32.mxu0 0.0
        %1164 = vmatmul.mubr.f32.gmra.mrb[0].mxu0 %v676
        %v1165 = vpop.f32.mrb[0].mxu0
        %v1166 = vadd.f32 0.0, %v1165
        %v1167 = vpop.f32.mrb[0].mxu0
        %1168 = vmatprep.mubr.f32.mxu0 0.0
        %1169 = vmatmul.mubr.f32.gmra.mrb[0].mxu0 %v679
        %v1170 = vpop.f32.mrb[0].mxu0
        %v1171 = vadd.f32 0.0, %v1170
        %v1172 = vpop.f32.mrb[0].mxu0
        %1173 = vmatprep.mubr.f32.mxu0 0.0
        %1174 = vmatmul.mubr.f32.gmra.mrb[0].mxu0 %v682
        %v1175 = vpop.f32.mrb[0].mxu0
        %v1176 = vadd.f32 0.0, %v1175
        %v1177 = vpop.f32.mrb[0].mxu0
        %1178 = vmatprep.mubr.f32.mxu0 0.0
        %1179 = vmatmul.mubr.f32.gmra.mrb[0].mxu0 %v685
        %v1180 = vpop.f32.mrb[0].mxu0
        %v1181 = vadd.f32 0.0, %v1180
        %v1182 = vpop.f32.mrb[0].mxu0
        %1183 = vmatprep.mubr.f32.mxu0 0.0
        %1184 = vmatmul.mubr.f32.gmra.mrb[0].mxu0 %v688
        %v1185 = vpop.f32.mrb[0].mxu0
        %v1186 = vadd.f32 0.0, %v1185
        %v1187 = vpop.f32.mrb[0].mxu0
        %1188 = vmatprep.mubr.f32.mxu0 0.0
        %1189 = vmatmul.mubr.f32.gmra.mrb[0].mxu0 %v691
        %v1190 = vpop.f32.mrb[0].mxu0
        %v1191 = vadd.f32 0.0, %v1190
        %v1192 = vpop.f32.mrb[0].mxu0
        %1193 = vmatprep.mubr.f32.mxu0 0.0
        %1194 = vmatmul.mubr.f32.gmra.mrb[0].mxu0 %v694
        %v1195 = vpop.f32.mrb[0].mxu0
        %v1196 = vadd.f32 0.0, %v1195
        %v1197 = vpop.f32.mrb[0].mxu0
        %1198 = vmatprep.mubr.f32.mxu0 0.0
        %1199 = vmatmul.mubr.f32.gmra.mrb[0].mxu0 %v697
        %v1200 = vpop.f32.mrb[0].mxu0
        %v1201 = vadd.f32 0.0, %v1200
        %v1202 = vpop.f32.mrb[0].mxu0
        %1203 = vmatprep.mubr.f32.mxu0 0.0
        %1204 = vmatmul.mubr.f32.gmra.mrb[0].mxu0 %v700
        %v1205 = vpop.f32.mrb[0].mxu0
        %v1206 = vadd.f32 0.0, %v1205
        %v1207 = vpop.f32.mrb[0].mxu0
        %1208 = vmatprep.mubr.f32.mxu0 0.0
        %1209 = vmatmul.mubr.f32.gmra.mrb[0].mxu0 %v703
        %v1210 = vpop.f32.mrb[0].mxu0
        %v1211 = vadd.f32 0.0, %v1210
        %v1212 = vpop.f32.mrb[0].mxu0
        %1213 = vmatprep.mubr.f32.mxu0 0.0
        %1214 = vmatmul.mubr.f32.gmra.mrb[0].mxu0 %v706
        %v1215 = vpop.f32.mrb[0].mxu0
        %v1216 = vadd.f32 0.0, %v1215
        %v1217 = vpop.f32.mrb[0].mxu0
        %1218 = vmatprep.mubr.f32.mxu0 0.0
        %1219 = vmatmul.mubr.f32.gmra.mrb[0].mxu0 %v709
        %v1220 = vpop.f32.mrb[0].mxu0
        %v1221 = vadd.f32 0.0, %v1220
        %v1222 = vpop.f32.mrb[0].mxu0
        %1223 = vmatprep.mubr.f32.mxu0 0.0
        %1224 = vmatmul.mubr.f32.gmra.mrb[0].mxu0 %v712
        %v1225 = vpop.f32.mrb[0].mxu0
        %v1226 = vadd.f32 0.0, %v1225
        %v1227 = vpop.f32.mrb[0].mxu0
        %1228 = vmatprep.mubr.f32.mxu0 0.0
        %1229 = vmatmul.mubr.f32.gmra.mrb[0].mxu0 %v715
        %v1230 = vpop.f32.mrb[0].mxu0
        %v1231 = vadd.f32 0.0, %v1230
        %v1232 = vpop.f32.mrb[0].mxu0
        %1233 = vmatprep.mubr.f32.mxu0 0.0
        %1234 = vmatmul.mubr.f32.gmra.mrb[0].mxu0 %v718
        %v1235 = vpop.f32.mrb[0].mxu0
        %v1236 = vadd.f32 0.0, %v1235
        %v1237 = vpop.f32.mrb[0].mxu0
        %1238 = vmatprep.mubr.f32.mxu0 0.0
        %1239 = vmatmul.mubr.f32.gmra.mrb[0].mxu0 %v721
        %v1240 = vpop.f32.mrb[0].mxu0
        %v1241 = vadd.f32 0.0, %v1240
        %v1242 = vpop.f32.mrb[0].mxu0
        %1243 = vmatprep.mubr.f32.mxu0 0.0
        %1244 = vmatmul.mubr.f32.gmra.mrb[0].mxu0 %v724
        %v1245 = vpop.f32.mrb[0].mxu0
        %v1246 = vadd.f32 0.0, %v1245
        %v1247 = vpop.f32.mrb[0].mxu0
        %1248 = vmatprep.mubr.f32.mxu0 0.0
        %1249 = vmatmul.mubr.f32.gmra.mrb[0].mxu0 %v727
        %v1250 = vpop.f32.mrb[0].mxu0
        %v1251 = vadd.f32 0.0, %v1250
        %v1252 = vpop.f32.mrb[0].mxu0
        %1253 = vmatprep.mubr.f32.mxu0 0.0
        %1254 = vmatmul.mubr.f32.gmra.mrb[0].mxu0 %v730
        %v1255 = vpop.f32.mrb[0].mxu0
        %v1256 = vadd.f32 0.0, %v1255
        %v1257 = vpop.f32.mrb[0].mxu0
        %1258 = vmatprep.mubr.f32.mxu0 0.0
        %1259 = vmatmul.mubr.f32.gmra.mrb[0].mxu0 %v733
        %v1260 = vpop.f32.mrb[0].mxu0
        %v1261 = vadd.f32 0.0, %v1260
        %v1262 = vpop.f32.mrb[0].mxu0
        %1263 = vmatprep.mubr.f32.mxu0 0.0
        %1264 = vmatmul.mubr.f32.gmra.mrb[0].mxu0 %v736
        %v1265 = vpop.f32.mrb[0].mxu0
        %v1266 = vadd.f32 0.0, %v1265
        %v1267 = vpop.f32.mrb[0].mxu0
        %1268 = vmatprep.mubr.f32.mxu0 0.0
        %1269 = vmatmul.mubr.f32.gmra.mrb[0].mxu0 %v739
        %v1270 = vpop.f32.mrb[0].mxu0
        %v1271 = vadd.f32 0.0, %v1270
        %v1272 = vpop.f32.mrb[0].mxu0
        %1273 = vmatprep.mubr.f32.mxu0 0.0
        %1274 = vmatmul.mubr.f32.gmra.mrb[0].mxu0 %v742
        %v1275 = vpop.f32.mrb[0].mxu0
        %v1276 = vadd.f32 0.0, %v1275
        %v1277 = vpop.f32.mrb[0].mxu0
        %1278 = vmatprep.mubr.f32.mxu0 0.0
        %1279 = vmatmul.mubr.f32.gmra.mrb[0].mxu0 %v745
        %v1280 = vpop.f32.mrb[0].mxu0
        %v1281 = vadd.f32 0.0, %v1280
        %v1282 = vpop.f32.mrb[0].mxu0
        %1283 = vmatprep.mubr.f32.mxu0 0.0
        %1284 = vmatmul.mubr.f32.gmra.mrb[0].mxu0 %v748
        %v1285 = vpop.f32.mrb[0].mxu0
        %v1286 = vadd.f32 0.0, %v1285
        %v1287 = vpop.f32.mrb[0].mxu0
        %1288 = vmatprep.mubr.f32.mxu0 0.0
        %1289 = vmatmul.mubr.f32.gmra.mrb[0].mxu0 %v751
        %v1290 = vpop.f32.mrb[0].mxu0
        %v1291 = vadd.f32 0.0, %v1290
        %v1292 = vpop.f32.mrb[0].mxu0
        %1293 = vmatprep.mubr.f32.mxu0 0.0
        %1294 = vmatmul.mubr.f32.gmra.mrb[0].mxu0 %v754
        %v1295 = vpop.f32.mrb[0].mxu0
        %v1296 = vadd.f32 0.0, %v1295
        %v1297 = vpop.f32.mrb[0].mxu0
        %1298 = vmatprep.mubr.f32.mxu0 0.0
        %1299 = vmatmul.mubr.f32.gmra.mrb[0].mxu0 %v757
        %v1300 = vpop.f32.mrb[0].mxu0
        %v1301 = vadd.f32 0.0, %v1300
        %v1302 = vpop.f32.mrb[0].mxu0
        %1303 = vmatprep.mubr.f32.mxu0 0.0
        %1304 = vmatmul.mubr.f32.gmra.mrb[0].mxu0 %v760
        %v1305 = vpop.f32.mrb[0].mxu0
        %v1306 = vadd.f32 0.0, %v1305
        %v1307 = vpop.f32.mrb[0].mxu0
        %1308 = vmatprep.mubr.f32.mxu0 0.0
        %1309 = vmatmul.mubr.f32.gmra.mrb[0].mxu0 %v763
        %v1310 = vpop.f32.mrb[0].mxu0
        %v1311 = vadd.f32 0.0, %v1310
        %v1312 = vpop.f32.mrb[0].mxu0
        %1313 = vmatprep.mubr.f32.mxu0 0.0
        %1314 = vmatmul.mubr.f32.gmra.mrb[0].mxu0 %v766
        %v1315 = vpop.f32.mrb[0].mxu0
        %v1316 = vadd.f32 0.0, %v1315
        %v1317 = vpop.f32.mrb[0].mxu0
        %1318 = vmatprep.mubr.f32.mxu0 0.0
        %1319 = vmatmul.mubr.f32.gmra.mrb[0].mxu0 %v769
        %v1320 = vpop.f32.mrb[0].mxu0
        %v1321 = vadd.f32 0.0, %v1320
        %v1322 = vpop.f32.mrb[0].mxu0
        %1323 = vmatprep.mubr.f32.mxu0 0.0
        %1324 = vmatmul.mubr.f32.gmra.mrb[0].mxu0 %v772
        %v1325 = vpop.f32.mrb[0].mxu0
        %v1326 = vadd.f32 0.0, %v1325
        %v1327 = vpop.f32.mrb[0].mxu0
        %1328 = vmatprep.mubr.f32.mxu0 0.0
        %1329 = vmatmul.mubr.f32.gmra.mrb[0].mxu0 %v775
        %v1330 = vpop.f32.mrb[0].mxu0
        %v1331 = vadd.f32 0.0, %v1330
        %v1332 = vpop.f32.mrb[0].mxu0
        %1333 = vmatprep.mubr.f32.mxu0 0.0
        %1334 = vmatmul.mubr.f32.gmra.mrb[0].mxu0 %v778
        %v1335 = vpop.f32.mrb[0].mxu0
        %v1336 = vadd.f32 0.0, %v1335
        %v1337 = vpop.f32.mrb[0].mxu0
        %1338 = vmatprep.mubr.f32.mxu0 0.0
        %1339 = vmatmul.mubr.f32.gmra.mrb[0].mxu0 %v781
        %v1340 = vpop.f32.mrb[0].mxu0
        %v1341 = vadd.f32 0.0, %v1340
        %v1342 = vpop.f32.mrb[0].mxu0
        %1343 = vmatprep.mubr.f32.mxu0 0.0
        %1344 = vmatmul.mubr.f32.gmra.mrb[0].mxu0 %v784
        %v1345 = vpop.f32.mrb[0].mxu0
        %v1346 = vadd.f32 0.0, %v1345
        %v1347 = vpop.f32.mrb[0].mxu0
        %1348 = vmatprep.mubr.f32.mxu0 0.0
        %1349 = vmatmul.mubr.f32.gmra.mrb[0].mxu0 %v787
        %v1350 = vpop.f32.mrb[0].mxu0
        %v1351 = vadd.f32 0.0, %v1350
        %v1352 = vpop.f32.mrb[0].mxu0
        %1353 = vmatprep.mubr.f32.mxu0 0.0
        %1354 = vmatmul.mubr.f32.gmra.mrb[0].mxu0 %v790
        %v1355 = vpop.f32.mrb[0].mxu0
        %v1356 = vadd.f32 0.0, %v1355
        %v1357 = vpop.f32.mrb[0].mxu0
        %1358 = vmatprep.mubr.f32.mxu0 0.0
        %1359 = vmatmul.mubr.f32.gmra.mrb[0].mxu0 %v793
        %v1360 = vpop.f32.mrb[0].mxu0
        %v1361 = vadd.f32 0.0, %v1360
        %v1362 = vpop.f32.mrb[0].mxu0
        %1363 = vmatprep.mubr.f32.mxu0 0.0
        %1364 = vmatmul.mubr.f32.gmra.mrb[0].mxu0 %v796
        %v1365 = vpop.f32.mrb[0].mxu0
        %v1366 = vadd.f32 0.0, %v1365
        %v1367 = vpop.f32.mrb[0].mxu0
        %1368 = vmatprep.mubr.f32.mxu0 0.0
        %1369 = vmatmul.mubr.f32.gmra.mrb[0].mxu0 %v799
        %v1370 = vpop.f32.mrb[0].mxu0
        %v1371 = vadd.f32 0.0, %v1370
        %v1372 = vpop.f32.mrb[0].mxu0
        %1373 = vmatprep.mubr.f32.mxu0 0.0
        %1374 = vmatmul.mubr.f32.gmra.mrb[0].mxu0 %v802
        %v1375 = vpop.f32.mrb[0].mxu0
        %v1376 = vadd.f32 0.0, %v1375
        %v1377 = vpop.f32.mrb[0].mxu0
        %1378 = vmatprep.mubr.f32.mxu0 0.0
        %1379 = vmatmul.mubr.f32.gmra.mrb[0].mxu0 %v805
        %v1380 = vpop.f32.mrb[0].mxu0
        %v1381 = vadd.f32 0.0, %v1380
        %v1382 = vpop.f32.mrb[0].mxu0
        %1383 = vmatprep.mubr.f32.mxu0 0.0
        %1384 = vmatmul.mubr.f32.gmra.mrb[0].mxu0 %v808
        %v1385 = vpop.f32.mrb[0].mxu0
        %v1386 = vadd.f32 0.0, %v1385
        %v1387 = vpop.f32.mrb[0].mxu0
        %1388 = vmatprep.mubr.f32.mxu0 0.0
        %1389 = vmatmul.mubr.f32.gmra.mrb[0].mxu0 %v811
        %v1390 = vpop.f32.mrb[0].mxu0
        %v1391 = vadd.f32 0.0, %v1390
        %v1392 = vpop.f32.mrb[0].mxu0
        %1393 = vmatprep.mubr.f32.mxu0 0.0
        %1394 = vmatmul.mubr.f32.gmra.mrb[0].mxu0 %v814
        %v1395 = vpop.f32.mrb[0].mxu0
        %v1396 = vadd.f32 0.0, %v1395
        %v1397 = vpop.f32.mrb[0].mxu0
        %1398 = vmatprep.mubr.f32.mxu0 0.0
        %1399 = vmatmul.mubr.f32.gmra.mrb[0].mxu0 %v817
        %v1400 = vpop.f32.mrb[0].mxu0
        %v1401 = vadd.f32 0.0, %v1400
        %v1402 = vpop.f32.mrb[0].mxu0
        %1403 = vmatprep.mubr.f32.mxu0 0.0
        %1404 = vmatmul.mubr.f32.gmra.mrb[0].mxu0 %v820
        %v1405 = vpop.f32.mrb[0].mxu0
        %v1406 = vadd.f32 0.0, %v1405
        %v1407 = vpop.f32.mrb[0].mxu0
        %1408 = vmatprep.mubr.f32.mxu0 0.0
        %1409 = vmatmul.mubr.f32.gmra.mrb[0].mxu0 %v823
        %v1410 = vpop.f32.mrb[0].mxu0
        %v1411 = vadd.f32 0.0, %v1410
        %v1412 = vpop.f32.mrb[0].mxu0
        %1413 = vmatprep.mubr.f32.mxu0 0.0
        %1414 = vmatmul.mubr.f32.gmra.mrb[0].mxu0 %v826
        %v1415 = vpop.f32.mrb[0].mxu0
        %v1416 = vadd.f32 0.0, %v1415
        %v1417 = vpop.f32.mrb[0].mxu0
        %1418 = vmatprep.mubr.f32.mxu0 0.0
        %1419 = vmatmul.mubr.f32.gmra.mrb[0].mxu0 %v829
        %v1420 = vpop.f32.mrb[0].mxu0
        %v1421 = vadd.f32 0.0, %v1420
        %v1422 = vpop.f32.mrb[0].mxu0
        %1423 = vmatprep.mubr.f32.mxu0 0.0
        %1424 = vmatmul.mubr.f32.gmra.mrb[0].mxu0 %v832
        %v1425 = vpop.f32.mrb[0].mxu0
        %v1426 = vadd.f32 0.0, %v1425
        %v1427 = vpop.f32.mrb[0].mxu0
        %1428 = vmatprep.mubr.f32.mxu0 0.0
        %1429 = vmatmul.mubr.f32.gmra.mrb[0].mxu0 %v835
        %v1430 = vpop.f32.mrb[0].mxu0
        %v1431 = vadd.f32 0.0, %v1430
        %v1432 = vpop.f32.mrb[0].mxu0
        %1433 = vmatprep.mubr.f32.mxu0 0.0
        %1434 = vmatmul.mubr.f32.gmra.mrb[0].mxu0 %v838
        %v1435 = vpop.f32.mrb[0].mxu0
        %v1436 = vadd.f32 0.0, %v1435
        %v1437 = vpop.f32.mrb[0].mxu0
        %1438 = vmatprep.mubr.f32.mxu0 0.0
        %1439 = vmatmul.mubr.f32.gmra.mrb[0].mxu0 %v841
        %v1440 = vpop.f32.mrb[0].mxu0
        %v1441 = vadd.f32 0.0, %v1440
        %v1442 = vpop.f32.mrb[0].mxu0
        %1443 = vmatprep.mubr.f32.mxu0 0.0
        %1444 = vmatmul.mubr.f32.gmra.mrb[0].mxu0 %v844
        %v1445 = vpop.f32.mrb[0].mxu0
        %v1446 = vadd.f32 0.0, %v1445
        %v1447 = vpop.f32.mrb[0].mxu0
        %1448 = vmatprep.mubr.f32.mxu0 0.0
        %1449 = vmatmul.mubr.f32.gmra.mrb[0].mxu0 %v847
        %v1450 = vpop.f32.mrb[0].mxu0
        %v1451 = vadd.f32 0.0, %v1450
        %v1452 = vpop.f32.mrb[0].mxu0
        %1453 = vmatprep.mubr.f32.mxu0 0.0
        %1454 = vmatmul.mubr.f32.gmra.mrb[0].mxu0 %v850
        %v1455 = vpop.f32.mrb[0].mxu0
        %v1456 = vadd.f32 0.0, %v1455
        %v1457 = vpop.f32.mrb[0].mxu0
        %1458 = vmatprep.mubr.f32.mxu0 0.0
        %1459 = vmatmul.mubr.f32.gmra.mrb[0].mxu0 %v853
        %v1460 = vpop.f32.mrb[0].mxu0
        %v1461 = vadd.f32 0.0, %v1460
        %v1462 = vpop.f32.mrb[0].mxu0
        %1463 = vmatprep.mubr.f32.mxu0 0.0
        %1464 = vmatmul.mubr.f32.gmra.mrb[0].mxu0 %v856
        %v1465 = vpop.f32.mrb[0].mxu0
        %v1466 = vadd.f32 0.0, %v1465
        %v1467 = vpop.f32.mrb[0].mxu0
        %1468 = vmatprep.mubr.f32.mxu0 0.0
        %1469 = vmatmul.mubr.f32.gmra.mrb[0].mxu0 %v859
        %v1470 = vpop.f32.mrb[0].mxu0
        %v1471 = vadd.f32 0.0, %v1470
        %v1472 = vpop.f32.mrb[0].mxu0
        %1473 = vmatprep.mubr.f32.mxu0 0.0
        %1474 = vmatmul.mubr.f32.gmra.mrb[0].mxu0 %v862
        %v1475 = vpop.f32.mrb[0].mxu0
        %v1476 = vadd.f32 0.0, %v1475
        %v1477 = vpop.f32.mrb[0].mxu0
        %1478 = vmatprep.mubr.f32.mxu0 0.0
        %1479 = vmatmul.mubr.f32.gmra.mrb[0].mxu0 %v865
        %v1480 = vpop.f32.mrb[0].mxu0
        %v1481 = vadd.f32 0.0, %v1480
        %v1482 = vpop.f32.mrb[0].mxu0
        %1483 = vmatprep.mubr.f32.mxu0 0.0
        %1484 = vmatmul.mubr.f32.gmra.mrb[0].mxu0 %v868
        %v1485 = vpop.f32.mrb[0].mxu0
        %v1486 = vadd.f32 0.0, %v1485
        %v1487 = vpop.f32.mrb[0].mxu0
        %1488 = vmatprep.mubr.f32.mxu0 0.0
        %1489 = vmatmul.mubr.f32.gmra.mrb[0].mxu0 %v871
        %v1490 = vpop.f32.mrb[0].mxu0
        %v1491 = vadd.f32 0.0, %v1490
        %v1492 = vpop.f32.mrb[0].mxu0
        %1493 = vmatprep.mubr.f32.mxu0 0.0
        %1494 = vmatmul.mubr.f32.gmra.mrb[0].mxu0 %v874
        %v1495 = vpop.f32.mrb[0].mxu0
        %v1496 = vadd.f32 0.0, %v1495
        %v1497 = vpop.f32.mrb[0].mxu0
        %1498 = vmatprep.mubr.f32.mxu0 0.0
        %1499 = vmatmul.mubr.f32.gmra.mrb[0].mxu0 %v877
        %v1500 = vpop.f32.mrb[0].mxu0
        %v1501 = vadd.f32 0.0, %v1500
        %v1502 = vpop.f32.mrb[0].mxu0
        %1503 = vmatprep.mubr.f32.mxu0 0.0
        %1504 = vmatmul.mubr.f32.gmra.mrb[0].mxu0 %v880
        %v1505 = vpop.f32.mrb[0].mxu0
        %v1506 = vadd.f32 0.0, %v1505
        %v1507 = vpop.f32.mrb[0].mxu0
        %1508 = vmatprep.mubr.f32.mxu0 0.0
        %1509 = vmatmul.mubr.f32.gmra.mrb[0].mxu0 %v883
        %v1510 = vpop.f32.mrb[0].mxu0
        %v1511 = vadd.f32 0.0, %v1510
        %v1512 = vpop.f32.mrb[0].mxu0
        %1513 = vmatprep.mubr.f32.mxu0 0.0
        %1514 = vmatmul.mubr.f32.gmra.mrb[0].mxu0 %v886
        %v1515 = vpop.f32.mrb[0].mxu0
        %v1516 = vadd.f32 0.0, %v1515
        %v1517 = vpop.f32.mrb[0].mxu0
        %1518 = vmatprep.mubr.f32.mxu0 0.0
        %1519 = vmatmul.mubr.f32.gmra.mrb[0].mxu0 %v889
        %v1520 = vpop.f32.mrb[0].mxu0
        %v1521 = vadd.f32 0.0, %v1520
        %v1522 = vpop.f32.mrb[0].mxu0
        %1523 = vmatprep.mubr.f32.mxu0 0.0
        %1524 = vmatmul.mubr.f32.gmra.mrb[0].mxu0 %v892
        %v1525 = vpop.f32.mrb[0].mxu0
        %v1526 = vadd.f32 0.0, %v1525
        %v1527 = vpop.f32.mrb[0].mxu0
        %1528 = vmatprep.mubr.f32.mxu0 0.0
        %1529 = vmatmul.mubr.f32.gmra.mrb[0].mxu0 %v895
        %v1530 = vpop.f32.mrb[0].mxu0
        %v1531 = vadd.f32 0.0, %v1530
        %v1532 = vpop.f32.mrb[0].mxu0
        %1533 = vmatprep.mubr.f32.mxu0 0.0
        %1534 = vmatmul.mubr.f32.gmra.mrb[0].mxu0 %v898
        %v1535 = vpop.f32.mrb[0].mxu0
        %v1536 = vadd.f32 0.0, %v1535
        %v1537 = vpop.f32.mrb[0].mxu0
        %1538 = vmatprep.mubr.f32.mxu0 0.0
        %1539 = vmatmul.mubr.f32.gmra.mrb[0].mxu0 %v901
        %v1540 = vpop.f32.mrb[0].mxu0
        %v1541 = vadd.f32 0.0, %v1540
        %v1542 = vpop.f32.mrb[0].mxu0
        %1543 = vmatprep.mubr.f32.mxu0 0.0
        %1544 = vmatmul.mubr.f32.gmra.mrb[0].mxu0 %v904
        %v1545 = vpop.f32.mrb[0].mxu0
        %v1546 = vadd.f32 0.0, %v1545
        %v1547 = vpop.f32.mrb[0].mxu0
        %1548 = vmatprep.mubr.f32.mxu0 0.0
        %1549 = vmatmul.mubr.f32.gmra.mrb[0].mxu0 %v907
        %v1550 = vpop.f32.mrb[0].mxu0
        %v1551 = vadd.f32 0.0, %v1550
        %v1552 = vpop.f32.mrb[0].mxu0
        %1553 = vmatprep.mubr.f32.mxu0 0.0
        %1554 = vmatmul.mubr.f32.gmra.mrb[0].mxu0 %v910
        %v1555 = vpop.f32.mrb[0].mxu0
        %v1556 = vadd.f32 0.0, %v1555
        %v1557 = vpop.f32.mrb[0].mxu0
        %1558 = vmatprep.mubr.f32.mxu0 0.0
        %1559 = vmatmul.mubr.f32.gmra.mrb[0].mxu0 %v913
        %v1560 = vpop.f32.mrb[0].mxu0
        %v1561 = vadd.f32 0.0, %v1560
        %v1562 = vpop.f32.mrb[0].mxu0
        %1563 = vmatprep.mubr.f32.mxu0 0.0
        %1564 = vmatmul.mubr.f32.gmra.mrb[0].mxu0 %v916
        %v1565 = vpop.f32.mrb[0].mxu0
        %v1566 = vadd.f32 0.0, %v1565
        %v1567 = vpop.f32.mrb[0].mxu0
        %1568 = vmatprep.mubr.f32.mxu0 0.0
        %1569 = vmatmul.mubr.f32.gmra.mrb[0].mxu0 %v919
        %v1570 = vpop.f32.mrb[0].mxu0
        %v1571 = vadd.f32 0.0, %v1570
        %v1572 = vpop.f32.mrb[0].mxu0
        %1573 = vmatprep.mubr.f32.mxu0 0.0
        %1574 = vmatmul.mubr.f32.gmra.mrb[0].mxu0 %v922
        %v1575 = vpop.f32.mrb[0].mxu0
        %v1576 = vadd.f32 0.0, %v1575
        %v1577 = vpop.f32.mrb[0].mxu0
        %1578 = vmatprep.mubr.f32.mxu0 0.0
        %1579 = vmatmul.mubr.f32.gmra.mrb[0].mxu0 %v925
        %v1580 = vpop.f32.mrb[0].mxu0
        %v1581 = vadd.f32 0.0, %v1580
        %v1582 = vpop.f32.mrb[0].mxu0
        %1583 = vmatprep.mubr.f32.mxu0 0.0
        %1584 = vmatmul.mubr.f32.gmra.mrb[0].mxu0 %v928
        %v1585 = vpop.f32.mrb[0].mxu0
        %v1586 = vadd.f32 0.0, %v1585
        %v1587 = vpop.f32.mrb[0].mxu0
        %1588 = vmatprep.mubr.f32.mxu0 0.0
        %1589 = vmatmul.mubr.f32.gmra.mrb[0].mxu0 %v931
        %v1590 = vpop.f32.mrb[0].mxu0
        %v1591 = vadd.f32 0.0, %v1590
        %v1592 = vpop.f32.mrb[0].mxu0
        %1593 = vmatprep.mubr.f32.mxu0 0.0
        %1594 = vmatmul.mubr.f32.gmra.mrb[0].mxu0 %v934
        %v1595 = vpop.f32.mrb[0].mxu0
        %v1596 = vadd.f32 0.0, %v1595
        %v1597 = vpop.f32.mrb[0].mxu0
        %1598 = vmatprep.mubr.f32.mxu0 0.0
        %1599 = vmatmul.mubr.f32.gmra.mrb[0].mxu0 %v937
        %v1600 = vpop.f32.mrb[0].mxu0
        %v1601 = vadd.f32 0.0, %v1600
        %v1602 = vpop.f32.mrb[0].mxu0
        %1603 = vmatprep.mubr.f32.mxu0 0.0
        %1604 = vmatmul.mubr.f32.gmra.mrb[0].mxu0 %v940
        %v1605 = vpop.f32.mrb[0].mxu0
        %v1606 = vadd.f32 0.0, %v1605
        %v1607 = vpop.f32.mrb[0].mxu0
        %1608 = vmatprep.mubr.f32.mxu0 0.0
        %1609 = vmatmul.mubr.f32.gmra.mrb[0].mxu0 %v943
        %v1610 = vpop.f32.mrb[0].mxu0
        %v1611 = vadd.f32 0.0, %v1610
        %v1612 = vpop.f32.mrb[0].mxu0
        %1613 = vmatprep.mubr.f32.mxu0 0.0
        %1614 = vmatmul.mubr.f32.gmra.mrb[0].mxu0 %v946
        %v1615 = vpop.f32.mrb[0].mxu0
        %v1616 = vadd.f32 0.0, %v1615
        %v1617 = vpop.f32.mrb[0].mxu0
        %1618 = vmatprep.mubr.f32.mxu0 0.0
        %1619 = vmatmul.mubr.f32.gmra.mrb[0].mxu0 %v949
        %v1620 = vpop.f32.mrb[0].mxu0
        %v1621 = vadd.f32 0.0, %v1620
        %v1622 = vpop.f32.mrb[0].mxu0
        %1623 = vmatprep.mubr.f32.mxu0 0.0
        %1624 = vmatmul.mubr.f32.gmra.mrb[0].mxu0 %v952
        %v1625 = vpop.f32.mrb[0].mxu0
        %v1626 = vadd.f32 0.0, %v1625
        %v1627 = vpop.f32.mrb[0].mxu0
        %1628 = vmatprep.mubr.f32.mxu0 0.0
        %1629 = vmatmul.mubr.f32.gmra.mrb[0].mxu0 %v955
        %v1630 = vpop.f32.mrb[0].mxu0
        %v1631 = vadd.f32 0.0, %v1630
        %v1632 = vpop.f32.mrb[0].mxu0
        %1633 = vmatprep.mubr.f32.mxu0 0.0
        %1634 = vmatmul.mubr.f32.gmra.mrb[0].mxu0 %v958
        %v1635 = vpop.f32.mrb[0].mxu0
        %v1636 = vadd.f32 0.0, %v1635
        %v1637 = vpop.f32.mrb[0].mxu0
        %1638 = vmatprep.mubr.f32.mxu0 0.0
        %1639 = vmatmul.mubr.f32.gmra.mrb[0].mxu0 %v961
        %v1640 = vpop.f32.mrb[0].mxu0
        %v1641 = vadd.f32 0.0, %v1640
        %v1642 = vpop.f32.mrb[0].mxu0
        %1643 = vmatprep.mubr.f32.mxu0 0.0
        %1644 = vmatmul.mubr.f32.gmra.mrb[0].mxu0 %v964
        %v1645 = vpop.f32.mrb[0].mxu0
        %v1646 = vadd.f32 0.0, %v1645
        %v1647 = vpop.f32.mrb[0].mxu0
        %1648 = vmatprep.mubr.f32.mxu0 0.0
        %1649 = vmatmul.mubr.f32.gmra.mrb[0].mxu0 %v967
        %v1650 = vpop.f32.mrb[0].mxu0
        %v1651 = vadd.f32 0.0, %v1650
        %v1652 = vpop.f32.mrb[0].mxu0
        %1653 = vmatprep.mubr.f32.mxu0 0.0
        %1654 = vmatmul.mubr.f32.gmra.mrb[0].mxu0 %v970
        %v1655 = vpop.f32.mrb[0].mxu0
        %v1656 = vadd.f32 0.0, %v1655
        %v1657 = vpop.f32.mrb[0].mxu0
        %1658 = vmatprep.mubr.f32.mxu0 0.0
        %1659 = vmatmul.mubr.f32.gmra.mrb[0].mxu0 %v973
        %v1660 = vpop.f32.mrb[0].mxu0
        %v1661 = vadd.f32 0.0, %v1660
        %v1662 = vpop.f32.mrb[0].mxu0
        %1663 = vmatprep.mubr.f32.mxu0 0.0
        %1664 = vmatmul.mubr.f32.gmra.mrb[0].mxu0 %v976
        %v1665 = vpop.f32.mrb[0].mxu0
        %v1666 = vadd.f32 0.0, %v1665
        %v1667 = vpop.f32.mrb[0].mxu0
        %1668 = vmatprep.mubr.f32.mxu0 0.0
        %1669 = vmatmul.mubr.f32.gmra.mrb[0].mxu0 %v979
        %v1670 = vpop.f32.mrb[0].mxu0
        %v1671 = vadd.f32 0.0, %v1670
        %v1672 = vpop.f32.mrb[0].mxu0
        %1673 = vmatprep.mubr.f32.mxu0 0.0
        %1674 = vmatmul.mubr.f32.gmra.mrb[0].mxu0 %v982
        %v1675 = vpop.f32.mrb[0].mxu0
        %v1676 = vadd.f32 0.0, %v1675
        %v1677 = vpop.f32.mrb[0].mxu0
        %1678 = vmatprep.mubr.f32.mxu0 0.0
        %1679 = vmatmul.mubr.f32.gmra.mrb[0].mxu0 %v985
        %v1680 = vpop.f32.mrb[0].mxu0
        %v1681 = vadd.f32 0.0, %v1680
        %v1682 = vpop.f32.mrb[0].mxu0
        %1683 = vmatprep.mubr.f32.mxu0 0.0
        %1684 = vmatmul.mubr.f32.gmra.mrb[0].mxu0 %v988
        %v1685 = vpop.f32.mrb[0].mxu0
        %v1686 = vadd.f32 0.0, %v1685
        %v1687 = vpop.f32.mrb[0].mxu0
        %1688 = vmatprep.mubr.f32.mxu0 0.0
        %1689 = vmatmul.mubr.f32.gmra.mrb[0].mxu0 %v991
        %v1690 = vpop.f32.mrb[0].mxu0
        %v1691 = vadd.f32 0.0, %v1690
        %v1692 = vpop.f32.mrb[0].mxu0
        %1693 = vmatprep.mubr.f32.mxu0 0.0
        %1694 = vmatmul.mubr.f32.gmra.mrb[0].mxu0 %v994
        %v1695 = vpop.f32.mrb[0].mxu0
        %v1696 = vadd.f32 0.0, %v1695
        %v1697 = vpop.f32.mrb[0].mxu0
        %1698 = vmatprep.mubr.f32.mxu0 0.0
        %1699 = vmatmul.mubr.f32.gmra.mrb[0].mxu0 %v997
        %v1700 = vpop.f32.mrb[0].mxu0
        %v1701 = vadd.f32 0.0, %v1700
        %v1702 = vpop.f32.mrb[0].mxu0
        %1703 = vmatprep.mubr.f32.mxu0 0.0
        %1704 = vmatmul.mubr.f32.gmra.mrb[0].mxu0 %v1000
        %v1705 = vpop.f32.mrb[0].mxu0
        %v1706 = vadd.f32 0.0, %v1705
        %v1707 = vpop.f32.mrb[0].mxu0
        %1708 = vmatprep.mubr.f32.mxu0 0.0
        %1709 = vmatmul.mubr.f32.gmra.mrb[0].mxu0 %v1003
        %v1710 = vpop.f32.mrb[0].mxu0
        %v1711 = vadd.f32 0.0, %v1710
        %v1712 = vpop.f32.mrb[0].mxu0
        %1713 = vmatprep.mubr.f32.mxu0 0.0
        %1714 = vmatmul.mubr.f32.gmra.mrb[0].mxu0 %v1006
        %v1715 = vpop.f32.mrb[0].mxu0
        %v1716 = vadd.f32 0.0, %v1715
        %v1717 = vpop.f32.mrb[0].mxu0
        %1718 = vdwg.mxu0
        %1719 = vxpose.xlu0.b32.start [1/16] %v1081, 128
        %1720 = vxpose.xlu0.b32.cont [2/16] %v1086, 128
        %1721 = vxpose.xlu0.b32.cont [3/16] %v1091, 128
        %1722 = vxpose.xlu0.b32.cont [4/16] %v1096, 128
        %1723 = vxpose.xlu0.b32.cont [5/16] %v1101, 128
        %1724 = vxpose.xlu0.b32.cont [6/16] %v1106, 128
        %1725 = vxpose.xlu0.b32.cont [7/16] %v1111, 128
        %1726 = vxpose.xlu0.b32.cont [8/16] %v1116, 128
        %1727 = vxpose.xlu0.b32.cont [9/16] %v1121, 128
        %1728 = vxpose.xlu0.b32.cont [10/16] %v1126, 128
        %1729 = vxpose.xlu0.b32.cont [11/16] %v1131, 128
        %1730 = vxpose.xlu0.b32.cont [12/16] %v1136, 128
        %1731 = vxpose.xlu0.b32.cont [13/16] %v1141, 128
        %1732 = vxpose.xlu0.b32.cont [14/16] %v1146, 128
        %1733 = vxpose.xlu0.b32.cont [15/16] %v1151, 128
        %1734 = vxpose.xlu0.b32.end [16/16] %v1156, 128
        %v1735 = vpop.trf.xlu0
        %v1736 = vpop.trf.xlu0
        %v1737 = vpop.trf.xlu0
        %v1738 = vpop.trf.xlu0
        %v1739 = vpop.trf.xlu0
        %v1740 = vpop.trf.xlu0
        %v1741 = vpop.trf.xlu0
        %v1742 = vpop.trf.xlu0
        %v1743 = vpop.trf.xlu0
        %v1744 = vpop.trf.xlu0
        %v1745 = vpop.trf.xlu0
        %v1746 = vpop.trf.xlu0
        %v1747 = vpop.trf.xlu0
        %v1748 = vpop.trf.xlu0
        %v1749 = vpop.trf.xlu0
        %v1750 = vpop.trf.xlu0
        %1751 = vxpose.xlu0.b32.start [1/16] %v1161, 128
        %1752 = vxpose.xlu0.b32.cont [2/16] %v1166, 128
        %1753 = vxpose.xlu0.b32.cont [3/16] %v1171, 128
        %1754 = vxpose.xlu0.b32.cont [4/16] %v1176, 128
        %1755 = vxpose.xlu0.b32.cont [5/16] %v1181, 128
        %1756 = vxpose.xlu0.b32.cont [6/16] %v1186, 128
        %1757 = vxpose.xlu0.b32.cont [7/16] %v1191, 128
        %1758 = vxpose.xlu0.b32.cont [8/16] %v1196, 128
        %1759 = vxpose.xlu0.b32.cont [9/16] %v1201, 128
        %1760 = vxpose.xlu0.b32.cont [10/16] %v1206, 128
        %1761 = vxpose.xlu0.b32.cont [11/16] %v1211, 128
        %1762 = vxpose.xlu0.b32.cont [12/16] %v1216, 128
        %1763 = vxpose.xlu0.b32.cont [13/16] %v1221, 128
        %1764 = vxpose.xlu0.b32.cont [14/16] %v1226, 128
        %1765 = vxpose.xlu0.b32.cont [15/16] %v1231, 128
        %1766 = vxpose.xlu0.b32.end [16/16] %v1236, 128
        %v1767 = vpop.trf.xlu0
        %v1768 = vpop.trf.xlu0
        %v1769 = vpop.trf.xlu0
        %v1770 = vpop.trf.xlu0
        %v1771 = vpop.trf.xlu0
        %v1772 = vpop.trf.xlu0
        %v1773 = vpop.trf.xlu0
        %v1774 = vpop.trf.xlu0
        %v1775 = vpop.trf.xlu0
        %v1776 = vpop.trf.xlu0
        %v1777 = vpop.trf.xlu0
        %v1778 = vpop.trf.xlu0
        %v1779 = vpop.trf.xlu0
        %v1780 = vpop.trf.xlu0
        %v1781 = vpop.trf.xlu0
        %v1782 = vpop.trf.xlu0
        %1783 = vxpose.xlu0.b32.start [1/16] %v1241, 128
        %1784 = vxpose.xlu0.b32.cont [2/16] %v1246, 128
        %1785 = vxpose.xlu0.b32.cont [3/16] %v1251, 128
        %1786 = vxpose.xlu0.b32.cont [4/16] %v1256, 128
        %1787 = vxpose.xlu0.b32.cont [5/16] %v1261, 128
        %1788 = vxpose.xlu0.b32.cont [6/16] %v1266, 128
        %1789 = vxpose.xlu0.b32.cont [7/16] %v1271, 128
        %1790 = vxpose.xlu0.b32.cont [8/16] %v1276, 128
        %1791 = vxpose.xlu0.b32.cont [9/16] %v1281, 128
        %1792 = vxpose.xlu0.b32.cont [10/16] %v1286, 128
        %1793 = vxpose.xlu0.b32.cont [11/16] %v1291, 128
        %1794 = vxpose.xlu0.b32.cont [12/16] %v1296, 128
        %1795 = vxpose.xlu0.b32.cont [13/16] %v1301, 128
        %1796 = vxpose.xlu0.b32.cont [14/16] %v1306, 128
        %1797 = vxpose.xlu0.b32.cont [15/16] %v1311, 128
        %1798 = vxpose.xlu0.b32.end [16/16] %v1316, 128
        %v1799 = vpop.trf.xlu0
        %v1800 = vpop.trf.xlu0
        %v1801 = vpop.trf.xlu0
        %v1802 = vpop.trf.xlu0
        %v1803 = vpop.trf.xlu0
        %v1804 = vpop.trf.xlu0
        %v1805 = vpop.trf.xlu0
        %v1806 = vpop.trf.xlu0
        %v1807 = vpop.trf.xlu0
        %v1808 = vpop.trf.xlu0
        %v1809 = vpop.trf.xlu0
        %v1810 = vpop.trf.xlu0
        %v1811 = vpop.trf.xlu0
        %v1812 = vpop.trf.xlu0
        %v1813 = vpop.trf.xlu0
        %v1814 = vpop.trf.xlu0
        %1815 = vxpose.xlu0.b32.start [1/16] %v1321, 128
        %1816 = vxpose.xlu0.b32.cont [2/16] %v1326, 128
        %1817 = vxpose.xlu0.b32.cont [3/16] %v1331, 128
        %1818 = vxpose.xlu0.b32.cont [4/16] %v1336, 128
        %1819 = vxpose.xlu0.b32.cont [5/16] %v1341, 128
        %1820 = vxpose.xlu0.b32.cont [6/16] %v1346, 128
        %1821 = vxpose.xlu0.b32.cont [7/16] %v1351, 128
        %1822 = vxpose.xlu0.b32.cont [8/16] %v1356, 128
        %1823 = vxpose.xlu0.b32.cont [9/16] %v1361, 128
        %1824 = vxpose.xlu0.b32.cont [10/16] %v1366, 128
        %1825 = vxpose.xlu0.b32.cont [11/16] %v1371, 128
        %1826 = vxpose.xlu0.b32.cont [12/16] %v1376, 128
        %1827 = vxpose.xlu0.b32.cont [13/16] %v1381, 128
        %1828 = vxpose.xlu0.b32.cont [14/16] %v1386, 128
        %1829 = vxpose.xlu0.b32.cont [15/16] %v1391, 128
        %1830 = vxpose.xlu0.b32.end [16/16] %v1396, 128
        %v1831 = vpop.trf.xlu0
        %v1832 = vpop.trf.xlu0
        %v1833 = vpop.trf.xlu0
        %v1834 = vpop.trf.xlu0
        %v1835 = vpop.trf.xlu0
        %v1836 = vpop.trf.xlu0
        %v1837 = vpop.trf.xlu0
        %v1838 = vpop.trf.xlu0
        %v1839 = vpop.trf.xlu0
        %v1840 = vpop.trf.xlu0
        %v1841 = vpop.trf.xlu0
        %v1842 = vpop.trf.xlu0
        %v1843 = vpop.trf.xlu0
        %v1844 = vpop.trf.xlu0
        %v1845 = vpop.trf.xlu0
        %v1846 = vpop.trf.xlu0
        %1847 = vxpose.xlu0.b32.start [1/16] %v1401, 128
        %1848 = vxpose.xlu0.b32.cont [2/16] %v1406, 128
        %1849 = vxpose.xlu0.b32.cont [3/16] %v1411, 128
        %1850 = vxpose.xlu0.b32.cont [4/16] %v1416, 128
        %1851 = vxpose.xlu0.b32.cont [5/16] %v1421, 128
        %1852 = vxpose.xlu0.b32.cont [6/16] %v1426, 128
        %1853 = vxpose.xlu0.b32.cont [7/16] %v1431, 128
        %1854 = vxpose.xlu0.b32.cont [8/16] %v1436, 128
        %1855 = vxpose.xlu0.b32.cont [9/16] %v1441, 128
        %1856 = vxpose.xlu0.b32.cont [10/16] %v1446, 128
        %1857 = vxpose.xlu0.b32.cont [11/16] %v1451, 128
        %1858 = vxpose.xlu0.b32.cont [12/16] %v1456, 128
        %1859 = vxpose.xlu0.b32.cont [13/16] %v1461, 128
        %1860 = vxpose.xlu0.b32.cont [14/16] %v1466, 128
        %1861 = vxpose.xlu0.b32.cont [15/16] %v1471, 128
        %1862 = vxpose.xlu0.b32.end [16/16] %v1476, 128
        %v1863 = vpop.trf.xlu0
        %v1864 = vpop.trf.xlu0
        %v1865 = vpop.trf.xlu0
        %v1866 = vpop.trf.xlu0
        %v1867 = vpop.trf.xlu0
        %v1868 = vpop.trf.xlu0
        %v1869 = vpop.trf.xlu0
        %v1870 = vpop.trf.xlu0
        %v1871 = vpop.trf.xlu0
        %v1872 = vpop.trf.xlu0
        %v1873 = vpop.trf.xlu0
        %v1874 = vpop.trf.xlu0
        %v1875 = vpop.trf.xlu0
        %v1876 = vpop.trf.xlu0
        %v1877 = vpop.trf.xlu0
        %v1878 = vpop.trf.xlu0
        %1879 = vxpose.xlu0.b32.start [1/16] %v1481, 128
        %1880 = vxpose.xlu0.b32.cont [2/16] %v1486, 128
        %1881 = vxpose.xlu0.b32.cont [3/16] %v1491, 128
        %1882 = vxpose.xlu0.b32.cont [4/16] %v1496, 128
        %1883 = vxpose.xlu0.b32.cont [5/16] %v1501, 128
        %1884 = vxpose.xlu0.b32.cont [6/16] %v1506, 128
        %1885 = vxpose.xlu0.b32.cont [7/16] %v1511, 128
        %1886 = vxpose.xlu0.b32.cont [8/16] %v1516, 128
        %1887 = vxpose.xlu0.b32.cont [9/16] %v1521, 128
        %1888 = vxpose.xlu0.b32.cont [10/16] %v1526, 128
        %1889 = vxpose.xlu0.b32.cont [11/16] %v1531, 128
        %1890 = vxpose.xlu0.b32.cont [12/16] %v1536, 128
        %1891 = vxpose.xlu0.b32.cont [13/16] %v1541, 128
        %1892 = vxpose.xlu0.b32.cont [14/16] %v1546, 128
        %1893 = vxpose.xlu0.b32.cont [15/16] %v1551, 128
        %1894 = vxpose.xlu0.b32.end [16/16] %v1556, 128
        %v1895 = vpop.trf.xlu0
        %v1896 = vpop.trf.xlu0
        %v1897 = vpop.trf.xlu0
        %v1898 = vpop.trf.xlu0
        %v1899 = vpop.trf.xlu0
        %v1900 = vpop.trf.xlu0
        %v1901 = vpop.trf.xlu0
        %v1902 = vpop.trf.xlu0
        %v1903 = vpop.trf.xlu0
        %v1904 = vpop.trf.xlu0
        %v1905 = vpop.trf.xlu0
        %v1906 = vpop.trf.xlu0
        %v1907 = vpop.trf.xlu0
        %v1908 = vpop.trf.xlu0
        %v1909 = vpop.trf.xlu0
        %v1910 = vpop.trf.xlu0
        %1911 = vxpose.xlu0.b32.start [1/16] %v1561, 128
        %1912 = vxpose.xlu0.b32.cont [2/16] %v1566, 128
        %1913 = vxpose.xlu0.b32.cont [3/16] %v1571, 128
        %1914 = vxpose.xlu0.b32.cont [4/16] %v1576, 128
        %1915 = vxpose.xlu0.b32.cont [5/16] %v1581, 128
        %1916 = vxpose.xlu0.b32.cont [6/16] %v1586, 128
        %1917 = vxpose.xlu0.b32.cont [7/16] %v1591, 128
        %1918 = vxpose.xlu0.b32.cont [8/16] %v1596, 128
        %1919 = vxpose.xlu0.b32.cont [9/16] %v1601, 128
        %1920 = vxpose.xlu0.b32.cont [10/16] %v1606, 128
        %1921 = vxpose.xlu0.b32.cont [11/16] %v1611, 128
        %1922 = vxpose.xlu0.b32.cont [12/16] %v1616, 128
        %1923 = vxpose.xlu0.b32.cont [13/16] %v1621, 128
        %1924 = vxpose.xlu0.b32.cont [14/16] %v1626, 128
        %1925 = vxpose.xlu0.b32.cont [15/16] %v1631, 128
        %1926 = vxpose.xlu0.b32.end [16/16] %v1636, 128
        %v1927 = vpop.trf.xlu0
        %v1928 = vpop.trf.xlu0
        %v1929 = vpop.trf.xlu0
        %v1930 = vpop.trf.xlu0
        %v1931 = vpop.trf.xlu0
        %v1932 = vpop.trf.xlu0
        %v1933 = vpop.trf.xlu0
        %v1934 = vpop.trf.xlu0
        %v1935 = vpop.trf.xlu0
        %v1936 = vpop.trf.xlu0
        %v1937 = vpop.trf.xlu0
        %v1938 = vpop.trf.xlu0
        %v1939 = vpop.trf.xlu0
        %v1940 = vpop.trf.xlu0
        %v1941 = vpop.trf.xlu0
        %v1942 = vpop.trf.xlu0
        %1943 = vxpose.xlu0.b32.start [1/16] %v1641, 128
        %1944 = vxpose.xlu0.b32.cont [2/16] %v1646, 128
        %1945 = vxpose.xlu0.b32.cont [3/16] %v1651, 128
        %1946 = vxpose.xlu0.b32.cont [4/16] %v1656, 128
        %1947 = vxpose.xlu0.b32.cont [5/16] %v1661, 128
        %1948 = vxpose.xlu0.b32.cont [6/16] %v1666, 128
        %1949 = vxpose.xlu0.b32.cont [7/16] %v1671, 128
        %1950 = vxpose.xlu0.b32.cont [8/16] %v1676, 128
        %1951 = vxpose.xlu0.b32.cont [9/16] %v1681, 128
        %1952 = vxpose.xlu0.b32.cont [10/16] %v1686, 128
        %1953 = vxpose.xlu0.b32.cont [11/16] %v1691, 128
        %1954 = vxpose.xlu0.b32.cont [12/16] %v1696, 128
        %1955 = vxpose.xlu0.b32.cont [13/16] %v1701, 128
        %1956 = vxpose.xlu0.b32.cont [14/16] %v1706, 128
        %1957 = vxpose.xlu0.b32.cont [15/16] %v1711, 128
        %1958 = vxpose.xlu0.b32.end [16/16] %v1716, 128
        %v1959 = vpop.trf.xlu0
        %v1960 = vpop.trf.xlu0
        %v1961 = vpop.trf.xlu0
        %v1962 = vpop.trf.xlu0
        %v1963 = vpop.trf.xlu0
        %v1964 = vpop.trf.xlu0
        %v1965 = vpop.trf.xlu0
        %v1966 = vpop.trf.xlu0
        %v1967 = vpop.trf.xlu0
        %v1968 = vpop.trf.xlu0
        %v1969 = vpop.trf.xlu0
        %v1970 = vpop.trf.xlu0
        %v1971 = vpop.trf.xlu0
        %v1972 = vpop.trf.xlu0
        %v1973 = vpop.trf.xlu0
        %v1974 = vpop.trf.xlu0
        %v1975 = vld [vmem:[%s3] sm:$0x1]
        %v1977 = vlaneseq
        %v1978 = vshrl.u32 %v1977, 7
        %v1979 = vsub.s32 0, %v1978
        %v1980 = vrot.slane %v1975, %v1979
        %1982 = vmatprep.subr.mxu0 0.0
        %1983 = vmatpush1.msra.mxu0 %v335
        %1984 = vmatprep.subr.mxu0 0.0
        %1985 = vmatpush1.msra.mxu0 %v336
        %1986 = vmatprep.subr.mxu0 0.0
        %1987 = vmatpush1.msra.mxu0 %v337
        %1988 = vmatprep.subr.mxu0 0.0
        %1989 = vmatpush1.msra.mxu0 %v338
        %1990 = vmatprep.subr.mxu0 0.0
        %1991 = vmatpush1.msra.mxu0 %v339
        %1992 = vmatprep.subr.mxu0 0.0
        %1993 = vmatpush1.msra.mxu0 %v340
        %1994 = vmatprep.subr.mxu0 0.0
        %1995 = vmatpush1.msra.mxu0 %v341
        %1996 = vmatprep.subr.mxu0 0.0
        %1997 = vmatpush1.msra.mxu0 %v342
        %1998 = vmatprep.subr.mxu0 0.0
        %1999 = vmatpush1.msra.mxu0 %v343
        %2000 = vmatprep.subr.mxu0 0.0
        %2001 = vmatpush1.msra.mxu0 %v344
        %2002 = vmatprep.subr.mxu0 0.0
        %2003 = vmatpush1.msra.mxu0 %v345
        %2004 = vmatprep.subr.mxu0 0.0
        %2005 = vmatpush1.msra.mxu0 %v346
        %2006 = vmatprep.subr.mxu0 0.0
        %2007 = vmatpush1.msra.mxu0 %v347
        %2008 = vmatprep.subr.mxu0 0.0
        %2009 = vmatpush1.msra.mxu0 %v348
        %2010 = vmatprep.subr.mxu0 0.0
        %2011 = vmatpush1.msra.mxu0 %v349
        %2012 = vmatprep.subr.mxu0 0.0
        %2013 = vmatpush1.msra.mxu0 %v350
        %2014 = vmatprep.subr.mxu0 0.0
        %2015 = vmatpush1.msra.mxu0 0.0
        %2016 = vmatprep.subr.mxu0 0.0
        %2017 = vmatpush1.msra.mxu0 0.0
        %2018 = vmatprep.subr.mxu0 0.0
        %2019 = vmatpush1.msra.mxu0 0.0
        %2020 = vmatprep.subr.mxu0 0.0
        %2021 = vmatpush1.msra.mxu0 0.0
        %2022 = vmatprep.subr.mxu0 0.0
        %2023 = vmatpush1.msra.mxu0 0.0
        %2024 = vmatprep.subr.mxu0 0.0
        %2025 = vmatpush1.msra.mxu0 0.0
        %2026 = vmatprep.subr.mxu0 0.0
        %2027 = vmatpush1.msra.mxu0 0.0
        %2028 = vmatprep.subr.mxu0 0.0
        %2029 = vmatpush1.msra.mxu0 0.0
        %2030 = vmatprep.subr.mxu0 0.0
        %2031 = vmatpush1.msra.mxu0 0.0
        %2032 = vmatprep.subr.mxu0 0.0
        %2033 = vmatpush1.msra.mxu0 0.0
        %2034 = vmatprep.subr.mxu0 0.0
        %2035 = vmatpush1.msra.mxu0 0.0
        %2036 = vmatprep.subr.mxu0 0.0
        %2037 = vmatpush1.msra.mxu0 0.0
        %2038 = vmatprep.subr.mxu0 0.0
        %2039 = vmatpush1.msra.mxu0 0.0
        %2040 = vmatprep.subr.mxu0 0.0
        %2041 = vmatpush1.msra.mxu0 0.0
        %2042 = vmatprep.subr.mxu0 0.0
        %2043 = vmatpush1.msra.mxu0 0.0
        %2044 = vmatprep.subr.mxu0 0.0
        %2045 = vmatpush1.msra.mxu0 0.0
        %2046 = vmatprep.mubr.f32.mxu0 0.0
        %2047 = vmatmul.mubr.f32.gmra.mrb[0].mxu0 %v1735
        %v2048 = vpop.f32.mrb[0].mxu0
        %v2049 = vadd.f32 %v1980, %v2048
        %v2050 = vpop.f32.mrb[0].mxu0
        %2051 = vmatprep.mubr.f32.mxu0 0.0
        %2052 = vmatmul.mubr.f32.gmra.mrb[0].mxu0 %v1736
        %v2053 = vpop.f32.mrb[0].mxu0
        %v2054 = vadd.f32 %v1980, %v2053
        %v2055 = vpop.f32.mrb[0].mxu0
        %2056 = vmatprep.mubr.f32.mxu0 0.0
        %2057 = vmatmul.mubr.f32.gmra.mrb[0].mxu0 %v1767
        %v2058 = vpop.f32.mrb[0].mxu0
        %v2059 = vadd.f32 %v1980, %v2058
        %v2060 = vpop.f32.mrb[0].mxu0
        %2061 = vmatprep.mubr.f32.mxu0 0.0
        %2062 = vmatmul.mubr.f32.gmra.mrb[0].mxu0 %v1768
        %v2063 = vpop.f32.mrb[0].mxu0
        %v2064 = vadd.f32 %v1980, %v2063
        %v2065 = vpop.f32.mrb[0].mxu0
        %2066 = vmatprep.mubr.f32.mxu0 0.0
        %2067 = vmatmul.mubr.f32.gmra.mrb[0].mxu0 %v1799
        %v2068 = vpop.f32.mrb[0].mxu0
        %v2069 = vadd.f32 %v1980, %v2068
        %v2070 = vpop.f32.mrb[0].mxu0
        %2071 = vmatprep.mubr.f32.mxu0 0.0
        %2072 = vmatmul.mubr.f32.gmra.mrb[0].mxu0 %v1800
        %v2073 = vpop.f32.mrb[0].mxu0
        %v2074 = vadd.f32 %v1980, %v2073
        %v2075 = vpop.f32.mrb[0].mxu0
        %2076 = vmatprep.mubr.f32.mxu0 0.0
        %2077 = vmatmul.mubr.f32.gmra.mrb[0].mxu0 %v1831
        %v2078 = vpop.f32.mrb[0].mxu0
        %v2079 = vadd.f32 %v1980, %v2078
        %v2080 = vpop.f32.mrb[0].mxu0
        %2081 = vmatprep.mubr.f32.mxu0 0.0
        %2082 = vmatmul.mubr.f32.gmra.mrb[0].mxu0 %v1832
        %v2083 = vpop.f32.mrb[0].mxu0
        %v2084 = vadd.f32 %v1980, %v2083
        %v2085 = vpop.f32.mrb[0].mxu0
        %2086 = vmatprep.mubr.f32.mxu0 0.0
        %2087 = vmatmul.mubr.f32.gmra.mrb[0].mxu0 %v1863
        %v2088 = vpop.f32.mrb[0].mxu0
        %v2089 = vadd.f32 %v1980, %v2088
        %v2090 = vpop.f32.mrb[0].mxu0
        %2091 = vmatprep.mubr.f32.mxu0 0.0
        %2092 = vmatmul.mubr.f32.gmra.mrb[0].mxu0 %v1864
        %v2093 = vpop.f32.mrb[0].mxu0
        %v2094 = vadd.f32 %v1980, %v2093
        %v2095 = vpop.f32.mrb[0].mxu0
        %2096 = vmatprep.mubr.f32.mxu0 0.0
        %2097 = vmatmul.mubr.f32.gmra.mrb[0].mxu0 %v1895
        %v2098 = vpop.f32.mrb[0].mxu0
        %v2099 = vadd.f32 %v1980, %v2098
        %v2100 = vpop.f32.mrb[0].mxu0
        %2101 = vmatprep.mubr.f32.mxu0 0.0
        %2102 = vmatmul.mubr.f32.gmra.mrb[0].mxu0 %v1896
        %v2103 = vpop.f32.mrb[0].mxu0
        %v2104 = vadd.f32 %v1980, %v2103
        %v2105 = vpop.f32.mrb[0].mxu0
        %2106 = vmatprep.mubr.f32.mxu0 0.0
        %2107 = vmatmul.mubr.f32.gmra.mrb[0].mxu0 %v1927
        %v2108 = vpop.f32.mrb[0].mxu0
        %v2109 = vadd.f32 %v1980, %v2108
        %v2110 = vpop.f32.mrb[0].mxu0
        %2111 = vmatprep.mubr.f32.mxu0 0.0
        %2112 = vmatmul.mubr.f32.gmra.mrb[0].mxu0 %v1928
        %v2113 = vpop.f32.mrb[0].mxu0
        %v2114 = vadd.f32 %v1980, %v2113
        %v2115 = vpop.f32.mrb[0].mxu0
        %2116 = vmatprep.mubr.f32.mxu0 0.0
        %2117 = vmatmul.mubr.f32.gmra.mrb[0].mxu0 %v1959
        %v2118 = vpop.f32.mrb[0].mxu0
        %v2119 = vadd.f32 %v1980, %v2118
        %v2120 = vpop.f32.mrb[0].mxu0
        %2121 = vmatprep.mubr.f32.mxu0 0.0
        %2122 = vmatmul.mubr.f32.gmra.mrb[0].mxu0 %v1960
        %v2123 = vpop.f32.mrb[0].mxu0
        %v2124 = vadd.f32 %v1980, %v2123
        %v2125 = vpop.f32.mrb[0].mxu0
        %2126 = vdwg.mxu0
        %v2127 = vtanh.pop %v2049
        %v2128 = vtanh.pop %v2054
        %v2129 = vtanh.pop %v2059
        %v2130 = vtanh.pop %v2064
        %v2131 = vtanh.pop %v2069
        %v2132 = vtanh.pop %v2074
        %v2133 = vtanh.pop %v2079
        %v2134 = vtanh.pop %v2084
        %v2135 = vtanh.pop %v2089
        %v2136 = vtanh.pop %v2094
        %v2137 = vtanh.pop %v2099
        %v2138 = vtanh.pop %v2104
        %v2139 = vtanh.pop %v2109
        %v2140 = vtanh.pop %v2114
        %v2141 = vtanh.pop %v2119
        %v2142 = vtanh.pop %v2124
        %v2143 = vld [vmem:[%s5] sm:$0x1]
        %v2145 = vlaneseq
        %v2146 = vshrl.u32 %v2145, 7
        %v2147 = vsub.s32 0, %v2146
        %v2148 = vrot.slane %v2143, %v2147
        %2150 = vmatprep.subr.mxu0 0.0
        %2151 = vmatpush1.msra.mxu0 %v351
        %2152 = vmatprep.subr.mxu0 0.0
        %2153 = vmatpush1.msra.mxu0 %v352
        %2154 = vmatprep.subr.mxu0 0.0
        %2155 = vmatpush1.msra.mxu0 %v353
        %2156 = vmatprep.subr.mxu0 0.0
        %2157 = vmatpush1.msra.mxu0 %v354
        %2158 = vmatprep.subr.mxu0 0.0
        %2159 = vmatpush1.msra.mxu0 %v355
        %2160 = vmatprep.subr.mxu0 0.0
        %2161 = vmatpush1.msra.mxu0 %v356
        %2162 = vmatprep.subr.mxu0 0.0
        %2163 = vmatpush1.msra.mxu0 %v357
        %2164 = vmatprep.subr.mxu0 0.0
        %2165 = vmatpush1.msra.mxu0 %v358
        %2166 = vmatprep.subr.mxu0 0.0
        %2167 = vmatpush1.msra.mxu0 %v359
        %2168 = vmatprep.subr.mxu0 0.0
        %2169 = vmatpush1.msra.mxu0 %v360
        %2170 = vmatprep.subr.mxu0 0.0
        %2171 = vmatpush1.msra.mxu0 %v361
        %2172 = vmatprep.subr.mxu0 0.0
        %2173 = vmatpush1.msra.mxu0 %v362
        %2174 = vmatprep.subr.mxu0 0.0
        %2175 = vmatpush1.msra.mxu0 %v363
        %2176 = vmatprep.subr.mxu0 0.0
        %2177 = vmatpush1.msra.mxu0 %v364
        %2178 = vmatprep.subr.mxu0 0.0
        %2179 = vmatpush1.msra.mxu0 %v365
        %2180 = vmatprep.subr.mxu0 0.0
        %2181 = vmatpush1.msra.mxu0 %v366
        %2182 = vmatprep.subr.mxu0 0.0
        %2183 = vmatpush1.msra.mxu0 0.0
        %2184 = vmatprep.subr.mxu0 0.0
        %2185 = vmatpush1.msra.mxu0 0.0
        %2186 = vmatprep.subr.mxu0 0.0
        %2187 = vmatpush1.msra.mxu0 0.0
        %2188 = vmatprep.subr.mxu0 0.0
        %2189 = vmatpush1.msra.mxu0 0.0
        %2190 = vmatprep.subr.mxu0 0.0
        %2191 = vmatpush1.msra.mxu0 0.0
        %2192 = vmatprep.subr.mxu0 0.0
        %2193 = vmatpush1.msra.mxu0 0.0
        %2194 = vmatprep.subr.mxu0 0.0
        %2195 = vmatpush1.msra.mxu0 0.0
        %2196 = vmatprep.subr.mxu0 0.0
        %2197 = vmatpush1.msra.mxu0 0.0
        %2198 = vmatprep.subr.mxu0 0.0
        %2199 = vmatpush1.msra.mxu0 0.0
        %2200 = vmatprep.subr.mxu0 0.0
        %2201 = vmatpush1.msra.mxu0 0.0
        %2202 = vmatprep.subr.mxu0 0.0
        %2203 = vmatpush1.msra.mxu0 0.0
        %2204 = vmatprep.subr.mxu0 0.0
        %2205 = vmatpush1.msra.mxu0 0.0
        %2206 = vmatprep.subr.mxu0 0.0
        %2207 = vmatpush1.msra.mxu0 0.0
        %2208 = vmatprep.subr.mxu0 0.0
        %2209 = vmatpush1.msra.mxu0 0.0
        %2210 = vmatprep.subr.mxu0 0.0
        %2211 = vmatpush1.msra.mxu0 0.0
        %2212 = vmatprep.subr.mxu0 0.0
        %2213 = vmatpush1.msra.mxu0 0.0
        %2214 = vmatprep.mubr.f32.mxu0 0.0
        %2215 = vmatmul.mubr.f32.gmra.mrb[0].mxu0 %v2127
        %v2216 = vpop.f32.mrb[0].mxu0
        %v2217 = vadd.f32 %v2148, %v2216
        %v2218 = vpop.f32.mrb[0].mxu0
        %2219 = vmatprep.mubr.f32.mxu0 0.0
        %2220 = vmatmul.mubr.f32.gmra.mrb[0].mxu0 %v2128
        %v2221 = vpop.f32.mrb[0].mxu0
        %v2222 = vadd.f32 %v2148, %v2221
        %v2223 = vpop.f32.mrb[0].mxu0
        %2224 = vmatprep.mubr.f32.mxu0 0.0
        %2225 = vmatmul.mubr.f32.gmra.mrb[0].mxu0 %v2129
        %v2226 = vpop.f32.mrb[0].mxu0
        %v2227 = vadd.f32 %v2148, %v2226
        %v2228 = vpop.f32.mrb[0].mxu0
        %2229 = vmatprep.mubr.f32.mxu0 0.0
        %2230 = vmatmul.mubr.f32.gmra.mrb[0].mxu0 %v2130
        %v2231 = vpop.f32.mrb[0].mxu0
        %v2232 = vadd.f32 %v2148, %v2231
        %v2233 = vpop.f32.mrb[0].mxu0
        %2234 = vmatprep.mubr.f32.mxu0 0.0
        %2235 = vmatmul.mubr.f32.gmra.mrb[0].mxu0 %v2131
        %v2236 = vpop.f32.mrb[0].mxu0
        %v2237 = vadd.f32 %v2148, %v2236
        %v2238 = vpop.f32.mrb[0].mxu0
        %2239 = vmatprep.mubr.f32.mxu0 0.0
        %2240 = vmatmul.mubr.f32.gmra.mrb[0].mxu0 %v2132
        %v2241 = vpop.f32.mrb[0].mxu0
        %v2242 = vadd.f32 %v2148, %v2241
        %v2243 = vpop.f32.mrb[0].mxu0
        %2244 = vmatprep.mubr.f32.mxu0 0.0
        %2245 = vmatmul.mubr.f32.gmra.mrb[0].mxu0 %v2133
        %v2246 = vpop.f32.mrb[0].mxu0
        %v2247 = vadd.f32 %v2148, %v2246
        %v2248 = vpop.f32.mrb[0].mxu0
        %2249 = vmatprep.mubr.f32.mxu0 0.0
        %2250 = vmatmul.mubr.f32.gmra.mrb[0].mxu0 %v2134
        %v2251 = vpop.f32.mrb[0].mxu0
        %v2252 = vadd.f32 %v2148, %v2251
        %v2253 = vpop.f32.mrb[0].mxu0
        %2254 = vmatprep.mubr.f32.mxu0 0.0
        %2255 = vmatmul.mubr.f32.gmra.mrb[0].mxu0 %v2135
        %v2256 = vpop.f32.mrb[0].mxu0
        %v2257 = vadd.f32 %v2148, %v2256
        %v2258 = vpop.f32.mrb[0].mxu0
        %2259 = vmatprep.mubr.f32.mxu0 0.0
        %2260 = vmatmul.mubr.f32.gmra.mrb[0].mxu0 %v2136
        %v2261 = vpop.f32.mrb[0].mxu0
        %v2262 = vadd.f32 %v2148, %v2261
        %v2263 = vpop.f32.mrb[0].mxu0
        %2264 = vmatprep.mubr.f32.mxu0 0.0
        %2265 = vmatmul.mubr.f32.gmra.mrb[0].mxu0 %v2137
        %v2266 = vpop.f32.mrb[0].mxu0
        %v2267 = vadd.f32 %v2148, %v2266
        %v2268 = vpop.f32.mrb[0].mxu0
        %2269 = vmatprep.mubr.f32.mxu0 0.0
        %2270 = vmatmul.mubr.f32.gmra.mrb[0].mxu0 %v2138
        %v2271 = vpop.f32.mrb[0].mxu0
        %v2272 = vadd.f32 %v2148, %v2271
        %v2273 = vpop.f32.mrb[0].mxu0
        %2274 = vmatprep.mubr.f32.mxu0 0.0
        %2275 = vmatmul.mubr.f32.gmra.mrb[0].mxu0 %v2139
        %v2276 = vpop.f32.mrb[0].mxu0
        %v2277 = vadd.f32 %v2148, %v2276
        %v2278 = vpop.f32.mrb[0].mxu0
        %2279 = vmatprep.mubr.f32.mxu0 0.0
        %2280 = vmatmul.mubr.f32.gmra.mrb[0].mxu0 %v2140
        %v2281 = vpop.f32.mrb[0].mxu0
        %v2282 = vadd.f32 %v2148, %v2281
        %v2283 = vpop.f32.mrb[0].mxu0
        %2284 = vmatprep.mubr.f32.mxu0 0.0
        %2285 = vmatmul.mubr.f32.gmra.mrb[0].mxu0 %v2141
        %v2286 = vpop.f32.mrb[0].mxu0
        %v2287 = vadd.f32 %v2148, %v2286
        %v2288 = vpop.f32.mrb[0].mxu0
        %2289 = vmatprep.mubr.f32.mxu0 0.0
        %2290 = vmatmul.mubr.f32.gmra.mrb[0].mxu0 %v2142
        %v2291 = vpop.f32.mrb[0].mxu0
        %v2292 = vadd.f32 %v2148, %v2291
        %v2293 = vpop.f32.mrb[0].mxu0
        %2294 = vdwg.mxu0
        %2295 = vst [vmem:[%s314] sm:$0xff] %v2217
        %2296 = vst [vmem:[%s314 + $0x8] sm:$0xff] %v2222
        %2297 = vst [vmem:[%s314 + $0x10] sm:$0xff] %v2227
        %2298 = vst [vmem:[%s314 + $0x18] sm:$0xff] %v2232
        %2299 = vst [vmem:[%s314 + $0x20] sm:$0xff] %v2237
        %2300 = vst [vmem:[%s314 + $0x28] sm:$0xff] %v2242
        %2301 = vst [vmem:[%s314 + $0x30] sm:$0xff] %v2247
        %2302 = vst [vmem:[%s314 + $0x38] sm:$0xff] %v2252
        %2303 = vst [vmem:[%s314 + $0x40] sm:$0xff] %v2257
        %2304 = vst [vmem:[%s314 + $0x48] sm:$0xff] %v2262
        %2305 = vst [vmem:[%s314 + $0x50] sm:$0xff] %v2267
        %2306 = vst [vmem:[%s314 + $0x58] sm:$0xff] %v2272
        %2307 = vst [vmem:[%s314 + $0x60] sm:$0xff] %v2277
        %2308 = vst [vmem:[%s314 + $0x68] sm:$0xff] %v2282
        %2309 = vst [vmem:[%s314 + $0x70] sm:$0xff] %v2287
        %2310 = vst [vmem:[%s314 + $0x78] sm:$0xff] %v2292
        %s2311 = sand.u32 %s164, 1
        %s2312 = scalar_lea.sflag [#allocation4], %s2311
        %s2313 = sand.u32 %s164, 1
        %s2314 = smul.addr %s2313, 128
        %s2315 = scalar_lea.vmem [#allocation10], %s2314
        // Predicated region
        $region61: #{tpu_custom_call.1} parent=43 // pred_check
          %p2316 = pneg %p174
        $region62: #{tpu_custom_call.1} parent=43 // pred_check_branch
          %2318 = sbr.rel (%p2316) target = $region64
        $region63: #{tpu_custom_call.1} parent=43 // pred_region
          %s2319 = smul.u32 8, %s25
          %s2321 = ssub.s32 2048, 2048
          %2322 = vsyncadd %s2312, %s2321
          %s2323 = smul.addr %s2319, 2
          %s2324 = smul.addr %s2323, 128
          %s2325 = scalar_lea.hbm %s6, %s2324
          %s2326 = sshll.u32 %s2315, 4
          %s2327 = int_to_ptr.vmem [resolvable:$true] %s2326
          %2332 = dma.vmem_to_hbm [thread:$0]  %s2327, 2048, %s2325, %s2312, 128, 128, 8
        $region64: #{tpu_custom_call.1} parent=43 // pred_fallthru
          _
      $region44: #{tpu_custom_call.1} parent=5 // pred_fallthru
        _
      %p2333 = scmp.le.s32.totalorder 2, %s20
      // Predicated region
      $region65: #{tpu_custom_call.1} parent=5 // pred_check
        %p2334 = pneg %p2333
      $region66: #{tpu_custom_call.1} parent=5 // pred_check_branch
        %2336 = sbr.rel (%p2334) target = $region68
      $region67: #{tpu_custom_call.1} parent=5 // pred_region
        %s2337 = ssub.s32 %s20, 2
        // Predicated region
        $region69: #{tpu_custom_call.1} parent=67 // pred_check
          %p2338 = pneg %p180
        $region70: #{tpu_custom_call.1} parent=67 // pred_check_branch
          %2340 = sbr.rel (%p2338) target = $region72
        $region71: #{tpu_custom_call.1} parent=67 // pred_region
          %s2341 = sand.u32 %s165, 1
          %s2342 = scalar_lea.sflag [#allocation4], %s2341
          %s2343 = sand.u32 %s165, 1
          %s2344 = smul.addr %s2343, 128
          %s2345 = scalar_lea.vmem [#allocation10], %s2344
          %2346 = dma.done %s2342, 2048
        $region72: #{tpu_custom_call.1} parent=67 // pred_fallthru
          _
      $region68: #{tpu_custom_call.1} parent=5 // pred_fallthru
        _
    $region6: #{tpu_custom_call.1} parent=1 // loop_footer
      %s24 = sadd.s32 1, %s20
    $region7: #{tpu_custom_call.1} parent=1 // loop_footer_branch
      %19 = sbr.rel target = $region3
    $region8: #{tpu_custom_call.1} parent=1 // loop_exit
      _
    %2347 = vsyncpa [#allocation3], 1
    %s2348 = scalar_lea.sflag [#allocation3], 1
    %2349 = vsyncpa %s2348, 1
    %2350 = vsyncpa [#allocation6], 1
    %2351 = vsyncpa [#allocation9], 1
    %2352 = vsyncpa [#allocation4], 1
    %s2353 = scalar_lea.sflag [#allocation4], 1
    %2354 = vsyncpa %s2353, 1

</llo_original>
